<compile_context>
chip_gen: v5e
topology: v5e:2x2
jax: 0.10.0
libtpu: 0.0.40
codegen_flags: <defaults>
</compile_context>

<pallas_src>
import functools

import jax
import jax.numpy as jnp
from jax.experimental import pallas as pl
from jax.experimental.pallas import tpu as pltpu


# ----------------------------------------------------------------------------
# Kernel
# ----------------------------------------------------------------------------
def _mha_kernel(x_ref, wqkv_ref, wo_ref, cos_ref, sin_ref, o_ref, ctx_ref, *,
                head_dim, heads_per_step, num_groups, q_tile):
    """One (batch, q-tile, head-group) grid step.

    x_ref   : (1, T, d_in)       bf16  (resident per batch element)
    wqkv_ref: (d_in, 3*HG*D)     bf16  this group's [Q-heads | K-heads | V-heads]
    wo_ref  : (d_out, d_in)      bf16  full Wo.T (used only on the last group)
    cos_ref : (T, D)             f32
    sin_ref : (T, D)             f32   sign-folded sin (first half negated)
    o_ref   : (1, TQ, d_in)      output block (written on the last group)
    ctx_ref : (G, TQ, HG*D)      bf16 scratch: per-head ctx across head groups
    """
    qi = pl.program_id(1)
    g = pl.program_id(2)

    D = head_dim
    HG = heads_per_step
    G = num_groups
    TQ = q_tile
    TK = q_tile                       # KV tile == Q tile (diagonal is tile qi)
    GD = HG * D
    half = D // 2
    scale = 1.0 / (D ** 0.5)
    neg_big = jnp.float32(-1e30)      # NaN-safe mask value

    wqkv = wqkv_ref[...]              # (d_in, 3*GD) bf16
    w_q = wqkv[:, :GD]
    w_kv = wqkv[:, GD:]               # hoisted: reused for every KV tile

    q_start = pl.multiple_of(qi * TQ, TQ)
    x_q = x_ref[0, pl.ds(q_start, TQ), :]            # (TQ, d_in) bf16
    cos_q = cos_ref[pl.ds(q_start, TQ), :]           # (TQ, D) f32
    sin_q = sin_ref[pl.ds(q_start, TQ), :]

    def rope(t, c, s_signed):                        # t: (rows, D) f32
        # rotate_half == roll(t, D/2); rotation sign is folded into s_signed.
        return t * c + pltpu.roll(t, shift=half, axis=1) * s_signed

    # Q projection for this head group: one MXU matmul, width HG*D.
    q_grp = jnp.dot(x_q, w_q, preferred_element_type=jnp.float32)  # (TQ, GD)
    q_heads = []
    for hi in range(HG):
        qh = q_grp[:, hi * D:(hi + 1) * D] * scale   # fold 1/sqrt(D) into q
        q_heads.append(rope(qh, cos_q, sin_q).astype(jnp.bfloat16))

    row_ids = q_start + jax.lax.broadcasted_iota(jnp.int32, (TQ, TK), 0)

    def kv_step(kt, carry):
        k_start = pl.multiple_of(kt * TK, TK)
        x_k = x_ref[0, pl.ds(k_start, TK), :]        # (TK, d_in) bf16
        # Fused K|V projection for the whole head group: width 2*HG*D.
        kv = jnp.dot(x_k, w_kv, preferred_element_type=jnp.float32)
        cos_k = cos_ref[pl.ds(k_start, TK), :]
        sin_k = sin_ref[pl.ds(k_start, TK), :]
        col_ids = k_start + jax.lax.broadcasted_iota(jnp.int32, (TQ, TK), 1)
        causal = col_ids > row_ids                   # only bites on diag tile

        new_carry = []
        for hi in range(HG):
            m, l, acc = carry[hi]
            k_h = rope(kv[:, hi * D:(hi + 1) * D], cos_k, sin_k)
            k_h = k_h.astype(jnp.bfloat16)
            v_h = kv[:, GD + hi * D: GD + (hi + 1) * D].astype(jnp.bfloat16)
            # scores[i, j] = q[i, :] . k[j, :]  (trans_b contraction, no .T)
            scores = jax.lax.dot_general(
                q_heads[hi], k_h, (((1,), (1,)), ((), ())),
                preferred_element_type=jnp.float32)   # (TQ, TK) f32
            scores = jnp.where(causal, neg_big, scores)

            # Online softmax update; PV accumulates UNNORMALIZED probs
            # (normalization deferred until after the KV loop).
            m_new = jnp.maximum(m, jnp.max(scores, axis=-1, keepdims=True))
            alpha = jnp.exp(m - m_new)
            p = jnp.exp(scores - m_new)
            l_new = alpha * l + jnp.sum(p, axis=-1, keepdims=True)
            acc_new = alpha * acc + jnp.dot(p.astype(jnp.bfloat16), v_h,
                                            preferred_element_type=jnp.float32)
            new_carry.append((m_new, l_new, acc_new))
        return tuple(new_carry)

    init = tuple((jnp.full((TQ, 1), -1e30, jnp.float32),
                  jnp.zeros((TQ, 1), jnp.float32),
                  jnp.zeros((TQ, D), jnp.float32)) for _ in range(HG))
    # Causal skipping: only KV tiles 0..qi (inclusive) contribute.
    carry = jax.lax.fori_loop(0, qi + 1, kv_step, init)

    # Deferred normalization (EUP reciprocal) + single store of this group's
    # context slab; no read-modify-write of a (TQ, d_in) accumulator.
    pieces = []
    for hi in range(HG):
        _, l, acc = carry[hi]
        ctx_h = acc * pl.reciprocal(l, approx=True)   # (TQ, D) f32
        pieces.append(ctx_h.astype(ctx_ref.dtype))
    ctx_ref[g] = pieces[0] if HG == 1 else jnp.concatenate(pieces, axis=-1)

    # Last head group: one fused out-projection with full contraction depth
    # (HG*D per chunk, all heads), then a single lane-dense output store.
    @pl.when(g == G - 1)
    def _():
        wo = wo_ref[...]                              # (d_out, d_in) bf16
        out = jnp.dot(ctx_ref[0], wo[:GD, :],
                      preferred_element_type=jnp.float32)
        for gg in range(1, G):
            out = out + jnp.dot(ctx_ref[gg], wo[gg * GD:(gg + 1) * GD, :],
                                preferred_element_type=jnp.float32)
        o_ref[0] = out.astype(o_ref.dtype)


# ----------------------------------------------------------------------------
# Host-side helpers
# ----------------------------------------------------------------------------
def precompute_rope_params(head_dim, theta_base=10000.0, context_length=4096):
    assert head_dim % 2 == 0
    inv_freq = 1.0 / theta_base ** (
        jnp.arange(0, head_dim // 2, dtype=jnp.float32) / (head_dim // 2))
    positions = jnp.arange(context_length, dtype=jnp.float32)
    angles = positions[:, None] * inv_freq[None, :]
    angles = jnp.concatenate([angles, angles], axis=1)      # (ctx, head_dim)
    return jnp.cos(angles), jnp.sin(angles)


def _pack_weights(wq, wk, wv, wo, num_heads, heads_per_step):
    """Fuse + pre-transpose weights on the host.

    Returns:
      wqkv: (d_in, 3*d_out) bf16, group-major; group g columns are
            [Q-heads(g) | K-heads(g) | V-heads(g)], each HG*D wide, head-major.
      wo_t: (d_out, d_in) bf16  (Wo.T, rows are head-major ctx channels).
    """
    d_out, d_in = wq.shape
    D = d_out // num_heads
    HG = heads_per_step
    G = num_heads // HG
    GD = HG * D
    wq_t, wk_t, wv_t = wq.T, wk.T, wv.T                     # (d_in, d_out)
    blocks = []
    for g in range(G):
        c0, c1 = g * GD, (g + 1) * GD
        blocks.append(jnp.concatenate(
            [wq_t[:, c0:c1], wk_t[:, c0:c1], wv_t[:, c0:c1]], axis=1))
    wqkv = jnp.concatenate(blocks, axis=1)                  # (d_in, 3*d_out)
    return wqkv.astype(jnp.bfloat16), wo.T.astype(jnp.bfloat16)


def _default_vmem_limit():
    """Generation-dependent VMEM limit (~85% of physical, capped)."""
    phys = 128 * 1024 * 1024
    try:
        cap = int(pltpu.get_tpu_info().vmem_capacity_bytes)
        if cap >= 32 * 1024 * 1024:
            phys = cap
    except Exception:
        pass
    # ~54 MiB on 64-MiB parts (v7x), ~108 MiB on 128-MiB parts (v5e/v6e).
    return min(int(phys * 0.85), 112 * 1024 * 1024)


def multi_head_attention(x, wq, wk, wv, wo, cos, sin, num_heads, *, q_tile=None):
    """Forward pass of the LLaMA-2 MultiHeadAttention module.

    x: (b, T, d_in); wq/wk/wv: (d_out, d_in); wo: (d_in, d_out)  (PyTorch layout)
    cos/sin: (context_length, head_dim)
    """
    b, T, d_in = x.shape
    d_out = wq.shape[0]
    assert d_out % num_heads == 0
    D = d_out // num_heads
    assert D % 2 == 0
    half = D // 2

    # 2 heads per grid step when possible (fills the 256-wide MXU on v6e/v7x).
    HG = 2 if num_heads % 2 == 0 else 1
    G = num_heads // HG
    GD = HG * D
    assert (3 * GD) % 128 == 0, "per-group QKV block must be 128-lane aligned"

    if q_tile is None:
        q_tile = min(T, 256)
    TQ = q_tile
    assert T % TQ == 0 and TQ % 8 == 0, "q_tile must divide T and be a multiple of 8"

    # Host-side layout prep (in a real model, pre-pack once).
    wqkv, wo_t = _pack_weights(wq, wk, wv, wo, num_heads, HG)
    cos_t = cos[:T, :].astype(jnp.float32)
    sign = jnp.concatenate([-jnp.ones((half,), jnp.float32),
                            jnp.ones((half,), jnp.float32)])
    sin_t = sin[:T, :].astype(jnp.float32) * sign[None, :]   # sign-folded sin
    x_bf = x.astype(jnp.bfloat16)

    kernel = functools.partial(_mha_kernel, head_dim=D, heads_per_step=HG,
                               num_groups=G, q_tile=TQ)

    return pl.pallas_call(
        kernel,
        out_shape=jax.ShapeDtypeStruct((b, T, d_in), x.dtype),
        grid_spec=pltpu.PrefetchScalarGridSpec(
            num_scalar_prefetch=0,
            grid=(b, T // TQ, G),
            in_specs=[
                # x: one DMA per batch element (index constant over qi, g).
                pl.BlockSpec((1, T, d_in), lambda bi, qi, g: (bi, 0, 0)),
                # fused QKV weights, streamed per head group.
                pl.BlockSpec((d_in, 3 * GD), lambda bi, qi, g: (0, g)),
                # Wo.T: one DMA per kernel call.
                pl.BlockSpec((d_out, d_in), lambda bi, qi, g: (0, 0)),
                pl.BlockSpec((T, D), lambda bi, qi, g: (0, 0)),      # cos
                pl.BlockSpec((T, D), lambda bi, qi, g: (0, 0)),      # signed sin
            ],
            out_specs=pl.BlockSpec((1, TQ, d_in), lambda bi, qi, g: (bi, qi, 0)),
            scratch_shapes=[pltpu.VMEM((G, TQ, GD), jnp.bfloat16)],
        ),
        compiler_params=pltpu.CompilerParams(
            # batch and q-tile axes are parallel (feeds both v7x TensorCores
            # even at small batch); head-group axis is the reduction.
            dimension_semantics=("parallel", "parallel", "arbitrary"),
            vmem_limit_bytes=_default_vmem_limit(),
        ),
    )(x_bf, wqkv, wo_t, cos_t, sin_t)


# ----------------------------------------------------------------------------
# Pure-JAX reference (mirrors the PyTorch forward), for verification.
# ----------------------------------------------------------------------------
def _reference_mha(x, wq, wk, wv, wo, cos, sin, num_heads):
    b, T, d_in = x.shape
    d_out = wq.shape[0]
    head_dim = d_out // num_heads

    def proj(w):
        y = jnp.einsum('btd,od->bto', x, w)
        return y.reshape(b, T, num_heads, head_dim).transpose(0, 2, 1, 3)

    q, k, v = proj(wq), proj(wk), proj(wv)

    c = cos[:T][None, None]
    s = sin[:T][None, None]

    def rope(t):
        t1, t2 = t[..., :head_dim // 2], t[..., head_dim // 2:]
        rot = jnp.concatenate([-t2, t1], axis=-1)
        return t * c + rot * s

    q, k = rope(q), rope(k)
    scores = jnp.einsum('bhqd,bhkd->bhqk', q, k)
    mask = jnp.triu(jnp.ones((T, T), bool), k=1)
    scores = jnp.where(mask, -jnp.inf, scores)
    attn = jax.nn.softmax(scores / head_dim ** 0.5, axis=-1)
    ctx = jnp.einsum('bhqk,bhkd->bhqd', attn, v)
    ctx = ctx.transpose(0, 2, 1, 3).reshape(b, T, d_out)
    return jnp.einsum('bto,do->btd', ctx, wo)


if __name__ == "__main__":
    # Small but representative: head_dim = 128 (lane-dense), 4 heads so the
    # 2-heads-per-step grouping and the head-group reduction are exercised,
    # 2 q-tiles so the causal KV-tile loop runs 1 and 2 iterations.
    batch, seq, d_in, d_out, num_heads = 2, 128, 256, 512, 4
    context_length = 256
    head_dim = d_out // num_heads

    key = jax.random.PRNGKey(0)
    kx, kq, kk, kv, ko = jax.random.split(key, 5)

    x = jax.random.normal(kx, (batch, seq, d_in), dtype=jnp.float32)
    # PyTorch-layout Linear weights (out_features, in_features), no bias.
    wq = jax.random.normal(kq, (d_out, d_in), dtype=jnp.float32) / jnp.sqrt(d_in)
    wk = jax.random.normal(kk, (d_out, d_in), dtype=jnp.float32) / jnp.sqrt(d_in)
    wv = jax.random.normal(kv, (d_out, d_in), dtype=jnp.float32) / jnp.sqrt(d_in)
    wo = jax.random.normal(ko, (d_in, d_out), dtype=jnp.float32) / jnp.sqrt(d_out)

    cos, sin = precompute_rope_params(head_dim, context_length=context_length)

    out = multi_head_attention(x, wq, wk, wv, wo, cos, sin, num_heads, q_tile=64)
    out = jax.block_until_ready(out)

    ref = _reference_mha(x, wq, wk, wv, wo, cos, sin, num_heads)
    assert out.shape == (batch, seq, d_in)
    # bf16 MXU operands + approx reciprocal vs a pure-f32 reference.
    max_err = float(jnp.max(jnp.abs(out - ref)))
    assert jnp.allclose(out, ref, atol=5e-2, rtol=5e-2), (
        f"mismatch vs reference (max abs err {max_err})")

    print("KERNEL_OK")
</pallas_src>

<mosaic_0001>
module attributes {stable_mosaic.version = 11 : i64} {
  func.func @_mha_kernel(%arg0: i32, %arg1: i32, %arg2: i32, %arg3: memref<1x128x256xbf16, #tpu.memory_space<vmem>>, %arg4: memref<256x768xbf16, #tpu.memory_space<vmem>>, %arg5: memref<512x256xbf16, #tpu.memory_space<vmem>>, %arg6: memref<128x128xf32, #tpu.memory_space<vmem>>, %arg7: memref<128x128xf32, #tpu.memory_space<vmem>>, %arg8: memref<1x64x256xf32, #tpu.memory_space<vmem>>, %arg9: memref<2x64x256xbf16, #tpu.memory_space<vmem>>) attributes {dimension_semantics = [#tpu.dimension_semantics<parallel>, #tpu.dimension_semantics<parallel>, #tpu.dimension_semantics<arbitrary>], iteration_bounds = array<i64: 2, 2, 2>, scalar_prefetch = 0 : i64, scratch_operands = 1 : i64, tpu.core_type = #tpu.core_type<tc>, window_params = [{transform_indices = @transform_0, window_bounds = array<i64: 1, 128, 256>}, {transform_indices = @transform_1, window_bounds = array<i64: 256, 768>}, {pipeline_mode = #tpu.pipeline_mode<synchronous>, transform_indices = @transform_2, window_bounds = array<i64: 512, 256>}, {pipeline_mode = #tpu.pipeline_mode<synchronous>, transform_indices = @transform_3, window_bounds = array<i64: 128, 128>}, {pipeline_mode = #tpu.pipeline_mode<synchronous>, transform_indices = @transform_4, window_bounds = array<i64: 128, 128>}, {transform_indices = @transform_5, window_bounds = array<i64: 1, 64, 256>}]} {
    %c0 = arith.constant 0 : index
    %c0_0 = arith.constant 0 : index
    %0 = vector.load %arg4[%c0, %c0_0] : memref<256x768xbf16, #tpu.memory_space<vmem>>, vector<256x768xbf16>
    %1 = vector.extract_strided_slice %0 {offsets = [0, 0], sizes = [256, 256], strides = [1, 1]} : vector<256x768xbf16> to vector<256x256xbf16>
    %2 = vector.extract_strided_slice %0 {offsets = [0, 256], sizes = [256, 512], strides = [1, 1]} : vector<256x768xbf16> to vector<256x512xbf16>
    %c64_i32 = arith.constant 64 : i32
    %3 = arith.muli %arg1, %c64_i32 : i32
    %4 = tpu.assume_multiple %3, 64 : i32
    %c0_1 = arith.constant 0 : index
    %5 = arith.index_cast %4 : i32 to index
    %c0_2 = arith.constant 0 : index
    %6 = vector.load %arg3[%c0_1, %5, %c0_2] : memref<1x128x256xbf16, #tpu.memory_space<vmem>>, vector<1x64x256xbf16>
    %7 = vector.shape_cast %6 : vector<1x64x256xbf16> to vector<64x256xbf16>
    %8 = arith.index_cast %4 : i32 to index
    %c0_3 = arith.constant 0 : index
    %9 = vector.load %arg6[%8, %c0_3] : memref<128x128xf32, #tpu.memory_space<vmem>>, vector<64x128xf32>
    %10 = arith.index_cast %4 : i32 to index
    %c0_4 = arith.constant 0 : index
    %11 = vector.load %arg7[%10, %c0_4] : memref<128x128xf32, #tpu.memory_space<vmem>>, vector<64x128xf32>
    %cst = arith.constant dense<0.000000e+00> : vector<64x256xf32>
    %12 = tpu.matmul %7, %1, %cst {dimension_numbers = #tpu.dot_dimension_numbers<[1], [0], [0], [1], [0, 0, 1, 1], [], []>} : vector<64x256xbf16>, vector<256x256xbf16>, vector<64x256xf32> -> vector<64x256xf32>
    %13 = vector.extract_strided_slice %12 {offsets = [0, 0], sizes = [64, 128], strides = [1, 1]} : vector<64x256xf32> to vector<64x128xf32>
    %cst_5 = arith.constant 0.0883883461 : f32
    %14 = vector.broadcast %cst_5 : f32 to vector<64x128xf32>
    %15 = arith.mulf %13, %14 : vector<64x128xf32>
    %16 = arith.mulf %15, %9 : vector<64x128xf32>
    %c64_i32_6 = arith.constant 64 : i32
    %17 = tpu.dynamic_rotate %15 by %c64_i32_6 dim 1 : vector<64x128xf32>, i32 -> vector<64x128xf32>
    %18 = arith.mulf %17, %11 : vector<64x128xf32>
    %19 = arith.addf %16, %18 : vector<64x128xf32>
    %20 = arith.truncf %19 : vector<64x128xf32> to vector<64x128xbf16>
    %21 = vector.extract_strided_slice %12 {offsets = [0, 128], sizes = [64, 128], strides = [1, 1]} : vector<64x256xf32> to vector<64x128xf32>
    %cst_7 = arith.constant 0.0883883461 : f32
    %22 = vector.broadcast %cst_7 : f32 to vector<64x128xf32>
    %23 = arith.mulf %21, %22 : vector<64x128xf32>
    %24 = arith.mulf %23, %9 : vector<64x128xf32>
    %c64_i32_8 = arith.constant 64 : i32
    %25 = tpu.dynamic_rotate %23 by %c64_i32_8 dim 1 : vector<64x128xf32>, i32 -> vector<64x128xf32>
    %26 = arith.mulf %25, %11 : vector<64x128xf32>
    %27 = arith.addf %24, %26 : vector<64x128xf32>
    %28 = arith.truncf %27 : vector<64x128xf32> to vector<64x128xbf16>
    %29 = tpu.iota {dimensions = array<i32: 0>} : vector<64x64xi32>
    %30 = vector.broadcast %4 : i32 to vector<64x64xi32>
    %31 = arith.addi %30, %29 : vector<64x64xi32>
    %cst_9 = arith.constant -1.000000e+30 : f32
    %32 = vector.broadcast %cst_9 : f32 to vector<64x1xf32>
    %cst_10 = arith.constant 0.000000e+00 : f32
    %33 = vector.broadcast %cst_10 : f32 to vector<64x1xf32>
    %cst_11 = arith.constant 0.000000e+00 : f32
    %34 = vector.broadcast %cst_11 : f32 to vector<64x128xf32>
    %cst_12 = arith.constant -1.000000e+30 : f32
    %35 = vector.broadcast %cst_12 : f32 to vector<64x1xf32>
    %cst_13 = arith.constant 0.000000e+00 : f32
    %36 = vector.broadcast %cst_13 : f32 to vector<64x1xf32>
    %cst_14 = arith.constant 0.000000e+00 : f32
    %37 = vector.broadcast %cst_14 : f32 to vector<64x128xf32>
    %c1_i32 = arith.constant 1 : i32
    %38 = arith.addi %arg1, %c1_i32 : i32
    %cst_15 = arith.constant -1.000000e+30 : f32
    %c0_i32 = arith.constant 0 : i32
    %39 = arith.subi %38, %c0_i32 : i32
    %40 = arith.addi %c0_i32, %39 : i32
    %c1_i32_16 = arith.constant 1 : i32
    %41:6 = scf.for %arg10 = %c0_i32 to %40 step %c1_i32_16 iter_args(%arg11 = %32, %arg12 = %33, %arg13 = %34, %arg14 = %35, %arg15 = %36, %arg16 = %37) -> (vector<64x1xf32>, vector<64x1xf32>, vector<64x128xf32>, vector<64x1xf32>, vector<64x1xf32>, vector<64x128xf32>)  : i32 {
      %c64_i32_21 = arith.constant 64 : i32
      %58 = arith.muli %arg10, %c64_i32_21 : i32
      %59 = tpu.assume_multiple %58, 64 : i32
      %c0_22 = arith.constant 0 : index
      %60 = arith.index_cast %59 : i32 to index
      %c0_23 = arith.constant 0 : index
      %61 = vector.load %arg3[%c0_22, %60, %c0_23] : memref<1x128x256xbf16, #tpu.memory_space<vmem>>, vector<1x64x256xbf16>
      %62 = vector.shape_cast %61 : vector<1x64x256xbf16> to vector<64x256xbf16>
      %cst_24 = arith.constant dense<0.000000e+00> : vector<64x512xf32>
      %63 = tpu.matmul %62, %2, %cst_24 {dimension_numbers = #tpu.dot_dimension_numbers<[1], [0], [0], [1], [0, 0, 1, 1], [], []>} : vector<64x256xbf16>, vector<256x512xbf16>, vector<64x512xf32> -> vector<64x512xf32>
      %64 = arith.index_cast %59 : i32 to index
      %c0_25 = arith.constant 0 : index
      %65 = vector.load %arg6[%64, %c0_25] : memref<128x128xf32, #tpu.memory_space<vmem>>, vector<64x128xf32>
      %66 = arith.index_cast %59 : i32 to index
      %c0_26 = arith.constant 0 : index
      %67 = vector.load %arg7[%66, %c0_26] : memref<128x128xf32, #tpu.memory_space<vmem>>, vector<64x128xf32>
      %68 = tpu.iota {dimensions = array<i32: 1>} : vector<64x64xi32>
      %69 = vector.broadcast %59 : i32 to vector<64x64xi32>
      %70 = arith.addi %69, %68 : vector<64x64xi32>
      %71 = arith.cmpi sgt, %70, %31 : vector<64x64xi32>
      %72 = vector.extract_strided_slice %63 {offsets = [0, 0], sizes = [64, 128], strides = [1, 1]} : vector<64x512xf32> to vector<64x128xf32>
      %73 = arith.mulf %72, %65 : vector<64x128xf32>
      %c64_i32_27 = arith.constant 64 : i32
      %74 = tpu.dynamic_rotate %72 by %c64_i32_27 dim 1 : vector<64x128xf32>, i32 -> vector<64x128xf32>
      %75 = arith.mulf %74, %67 : vector<64x128xf32>
      %76 = arith.addf %73, %75 : vector<64x128xf32>
      %77 = arith.truncf %76 : vector<64x128xf32> to vector<64x128xbf16>
      %78 = vector.extract_strided_slice %63 {offsets = [0, 256], sizes = [64, 128], strides = [1, 1]} : vector<64x512xf32> to vector<64x128xf32>
      %79 = arith.truncf %78 : vector<64x128xf32> to vector<64x128xbf16>
      %cst_28 = arith.constant dense<0.000000e+00> : vector<64x64xf32>
      %80 = tpu.matmul %20, %77, %cst_28 {dimension_numbers = #tpu.dot_dimension_numbers<[1], [1], [0], [0], [0, 0, 1, 0], [], []>} : vector<64x128xbf16>, vector<64x128xbf16>, vector<64x64xf32> -> vector<64x64xf32>
      %81 = vector.broadcast %cst_15 : f32 to vector<64x64xf32>
      %82 = arith.select %71, %81, %80 : vector<64x64xi1>, vector<64x64xf32>
      %cst_29 = arith.constant dense<0xFF800000> : vector<64xf32>
      %83 = vector.multi_reduction <maximumf>, %82, %cst_29 [1] : vector<64x64xf32> to vector<64xf32>
      %84 = vector.shape_cast %83 : vector<64xf32> to vector<64x1xf32>
      %85 = arith.maximumf %arg11, %84 : vector<64x1xf32>
      %86 = arith.subf %arg11, %85 : vector<64x1xf32>
      %87 = math.exp %86 : vector<64x1xf32>
      %88 = vector.broadcast %85 : vector<64x1xf32> to vector<64x64xf32>
      %89 = arith.subf %82, %88 : vector<64x64xf32>
      %90 = math.exp %89 : vector<64x64xf32>
      %91 = arith.mulf %87, %arg12 : vector<64x1xf32>
      %cst_30 = arith.constant dense<0.000000e+00> : vector<64xf32>
      %92 = vector.multi_reduction <add>, %90, %cst_30 [1] : vector<64x64xf32> to vector<64xf32>
      %93 = vector.shape_cast %92 : vector<64xf32> to vector<64x1xf32>
      %94 = arith.addf %91, %93 : vector<64x1xf32>
      %95 = vector.broadcast %87 : vector<64x1xf32> to vector<64x128xf32>
      %96 = arith.mulf %95, %arg13 : vector<64x128xf32>
      %97 = arith.truncf %90 : vector<64x64xf32> to vector<64x64xbf16>
      %cst_31 = arith.constant dense<0.000000e+00> : vector<64x128xf32>
      %98 = tpu.matmul %97, %79, %cst_31 {dimension_numbers = #tpu.dot_dimension_numbers<[1], [0], [0], [1], [0, 0, 1, 1], [], []>} : vector<64x64xbf16>, vector<64x128xbf16>, vector<64x128xf32> -> vector<64x128xf32>
      %99 = arith.addf %96, %98 : vector<64x128xf32>
      %100 = vector.extract_strided_slice %63 {offsets = [0, 128], sizes = [64, 128], strides = [1, 1]} : vector<64x512xf32> to vector<64x128xf32>
      %101 = arith.mulf %100, %65 : vector<64x128xf32>
      %c64_i32_32 = arith.constant 64 : i32
      %102 = tpu.dynamic_rotate %100 by %c64_i32_32 dim 1 : vector<64x128xf32>, i32 -> vector<64x128xf32>
      %103 = arith.mulf %102, %67 : vector<64x128xf32>
      %104 = arith.addf %101, %103 : vector<64x128xf32>
      %105 = arith.truncf %104 : vector<64x128xf32> to vector<64x128xbf16>
      %106 = vector.extract_strided_slice %63 {offsets = [0, 384], sizes = [64, 128], strides = [1, 1]} : vector<64x512xf32> to vector<64x128xf32>
      %107 = arith.truncf %106 : vector<64x128xf32> to vector<64x128xbf16>
      %cst_33 = arith.constant dense<0.000000e+00> : vector<64x64xf32>
      %108 = tpu.matmul %28, %105, %cst_33 {dimension_numbers = #tpu.dot_dimension_numbers<[1], [1], [0], [0], [0, 0, 1, 0], [], []>} : vector<64x128xbf16>, vector<64x128xbf16>, vector<64x64xf32> -> vector<64x64xf32>
      %109 = vector.broadcast %cst_15 : f32 to vector<64x64xf32>
      %110 = arith.select %71, %109, %108 : vector<64x64xi1>, vector<64x64xf32>
      %cst_34 = arith.constant dense<0xFF800000> : vector<64xf32>
      %111 = vector.multi_reduction <maximumf>, %110, %cst_34 [1] : vector<64x64xf32> to vector<64xf32>
      %112 = vector.shape_cast %111 : vector<64xf32> to vector<64x1xf32>
      %113 = arith.maximumf %arg14, %112 : vector<64x1xf32>
      %114 = arith.subf %arg14, %113 : vector<64x1xf32>
      %115 = math.exp %114 : vector<64x1xf32>
      %116 = vector.broadcast %113 : vector<64x1xf32> to vector<64x64xf32>
      %117 = arith.subf %110, %116 : vector<64x64xf32>
      %118 = math.exp %117 : vector<64x64xf32>
      %119 = arith.mulf %115, %arg15 : vector<64x1xf32>
      %cst_35 = arith.constant dense<0.000000e+00> : vector<64xf32>
      %120 = vector.multi_reduction <add>, %118, %cst_35 [1] : vector<64x64xf32> to vector<64xf32>
      %121 = vector.shape_cast %120 : vector<64xf32> to vector<64x1xf32>
      %122 = arith.addf %119, %121 : vector<64x1xf32>
      %123 = vector.broadcast %115 : vector<64x1xf32> to vector<64x128xf32>
      %124 = arith.mulf %123, %arg16 : vector<64x128xf32>
      %125 = arith.truncf %118 : vector<64x64xf32> to vector<64x64xbf16>
      %cst_36 = arith.constant dense<0.000000e+00> : vector<64x128xf32>
      %126 = tpu.matmul %125, %107, %cst_36 {dimension_numbers = #tpu.dot_dimension_numbers<[1], [0], [0], [1], [0, 0, 1, 1], [], []>} : vector<64x64xbf16>, vector<64x128xbf16>, vector<64x128xf32> -> vector<64x128xf32>
      %127 = arith.addf %124, %126 : vector<64x128xf32>
      scf.yield %85, %94, %99, %113, %122, %127 : vector<64x1xf32>, vector<64x1xf32>, vector<64x128xf32>, vector<64x1xf32>, vector<64x1xf32>, vector<64x128xf32>
    }
    %42 = tpu.reciprocal %41#1 {approx = true} : vector<64x1xf32> -> vector<64x1xf32>
    %43 = vector.broadcast %42 : vector<64x1xf32> to vector<64x128xf32>
    %44 = arith.mulf %41#2, %43 : vector<64x128xf32>
    %45 = arith.truncf %44 : vector<64x128xf32> to vector<64x128xbf16>
    %46 = tpu.reciprocal %41#4 {approx = true} : vector<64x1xf32> -> vector<64x1xf32>
    %47 = vector.broadcast %46 : vector<64x1xf32> to vector<64x128xf32>
    %48 = arith.mulf %41#5, %47 : vector<64x128xf32>
    %49 = arith.truncf %48 : vector<64x128xf32> to vector<64x128xbf16>
    %50 = tpu.concatenate %45, %49 in 1 : vector<64x128xbf16>, vector<64x128xbf16> -> vector<64x256xbf16>
    %51 = arith.index_cast %arg2 : i32 to index
    %c0_17 = arith.constant 0 : index
    %c0_18 = arith.constant 0 : index
    %52 = vector.load %arg9[%51, %c0_17, %c0_18] : memref<2x64x256xbf16, #tpu.memory_space<vmem>>, vector<1x64x256xbf16>
    %53 = vector.shape_cast %52 : vector<1x64x256xbf16> to vector<64x256xbf16>
    %54 = vector.shape_cast %50 : vector<64x256xbf16> to vector<1x64x256xbf16>
    tpu.vector_store %arg9[%51, %c0_17, %c0_18], %54 {strides = array<i32>} : memref<2x64x256xbf16, #tpu.memory_space<vmem>>, vector<1x64x256xbf16>,
    %c1_i32_19 = arith.constant 1 : i32
    %55 = arith.cmpi eq, %arg2, %c1_i32_19 : i32
    %56 = arith.extui %55 : i1 to i32
    %c0_i32_20 = arith.constant 0 : i32
    %57 = arith.cmpi ne, %56, %c0_i32_20 : i32
    scf.if %57 {
      %c0_21 = arith.constant 0 : index
      %c0_22 = arith.constant 0 : index
      %58 = vector.load %arg5[%c0_21, %c0_22] : memref<512x256xbf16, #tpu.memory_space<vmem>>, vector<512x256xbf16>
      %c0_23 = arith.constant 0 : index
      %c0_24 = arith.constant 0 : index
      %c0_25 = arith.constant 0 : index
      %59 = vector.load %arg9[%c0_23, %c0_24, %c0_25] : memref<2x64x256xbf16, #tpu.memory_space<vmem>>, vector<1x64x256xbf16>
      %60 = vector.shape_cast %59 : vector<1x64x256xbf16> to vector<64x256xbf16>
      %61 = vector.extract_strided_slice %58 {offsets = [0, 0], sizes = [256, 256], strides = [1, 1]} : vector<512x256xbf16> to vector<256x256xbf16>
      %cst_26 = arith.constant dense<0.000000e+00> : vector<64x256xf32>
      %62 = tpu.matmul %60, %61, %cst_26 {dimension_numbers = #tpu.dot_dimension_numbers<[1], [0], [0], [1], [0, 0, 1, 1], [], []>} : vector<64x256xbf16>, vector<256x256xbf16>, vector<64x256xf32> -> vector<64x256xf32>
      %c1 = arith.constant 1 : index
      %c0_27 = arith.constant 0 : index
      %c0_28 = arith.constant 0 : index
      %63 = vector.load %arg9[%c1, %c0_27, %c0_28] : memref<2x64x256xbf16, #tpu.memory_space<vmem>>, vector<1x64x256xbf16>
      %64 = vector.shape_cast %63 : vector<1x64x256xbf16> to vector<64x256xbf16>
      %65 = vector.extract_strided_slice %58 {offsets = [256, 0], sizes = [256, 256], strides = [1, 1]} : vector<512x256xbf16> to vector<256x256xbf16>
      %cst_29 = arith.constant dense<0.000000e+00> : vector<64x256xf32>
      %66 = tpu.matmul %64, %65, %cst_29 {dimension_numbers = #tpu.dot_dimension_numbers<[1], [0], [0], [1], [0, 0, 1, 1], [], []>} : vector<64x256xbf16>, vector<256x256xbf16>, vector<64x256xf32> -> vector<64x256xf32>
      %67 = arith.addf %62, %66 : vector<64x256xf32>
      %c0_30 = arith.constant 0 : index
      %c0_31 = arith.constant 0 : index
      %c0_32 = arith.constant 0 : index
      %68 = vector.load %arg8[%c0_30, %c0_31, %c0_32] : memref<1x64x256xf32, #tpu.memory_space<vmem>>, vector<1x64x256xf32>
      %69 = vector.shape_cast %68 : vector<1x64x256xf32> to vector<64x256xf32>
      %70 = vector.shape_cast %67 : vector<64x256xf32> to vector<1x64x256xf32>
      tpu.vector_store %arg8[%c0_30, %c0_31, %c0_32], %70 {strides = array<i32>} : memref<1x64x256xf32, #tpu.memory_space<vmem>>, vector<1x64x256xf32>,
    } else {
    }
    return
  }
  func.func @transform_0(%arg0: i32, %arg1: i32, %arg2: i32) -> (i32, i32, i32) {
    %c0_i32 = arith.constant 0 : i32
    %c0_i32_0 = arith.constant 0 : i32
    %c0_i32_1 = arith.constant 0 : i32
    return %arg0, %c0_i32, %c0_i32_0 : i32, i32, i32
  }
  func.func @transform_1(%arg0: i32, %arg1: i32, %arg2: i32) -> (i32, i32) {
    %c0_i32 = arith.constant 0 : i32
    %c0_i32_0 = arith.constant 0 : i32
    return %c0_i32, %arg2 : i32, i32
  }
  func.func @transform_2(%arg0: i32, %arg1: i32, %arg2: i32) -> (i32, i32) {
    %c0_i32 = arith.constant 0 : i32
    %c0_i32_0 = arith.constant 0 : i32
    %c0_i32_1 = arith.constant 0 : i32
    return %c0_i32, %c0_i32_0 : i32, i32
  }
  func.func @transform_3(%arg0: i32, %arg1: i32, %arg2: i32) -> (i32, i32) {
    %c0_i32 = arith.constant 0 : i32
    %c0_i32_0 = arith.constant 0 : i32
    %c0_i32_1 = arith.constant 0 : i32
    return %c0_i32, %c0_i32_0 : i32, i32
  }
  func.func @transform_4(%arg0: i32, %arg1: i32, %arg2: i32) -> (i32, i32) {
    %c0_i32 = arith.constant 0 : i32
    %c0_i32_0 = arith.constant 0 : i32
    %c0_i32_1 = arith.constant 0 : i32
    return %c0_i32, %c0_i32_0 : i32, i32
  }
  func.func @transform_5(%arg0: i32, %arg1: i32, %arg2: i32) -> (i32, i32, i32) {
    %c0_i32 = arith.constant 0 : i32
    %c0_i32_0 = arith.constant 0 : i32
    return %arg0, %arg1, %c0_i32 : i32, i32, i32
  }
}

</mosaic_0001>

<llo_original>
// kernel: tpu_custom_call.1
$region0: #{tpu_custom_call.1}
  #allocation0 [shape = 'u32[]', space=smem, size = 0x4, offset = 0x4, fixed_abs, tag = 'smem constant byte address 0x4 - core index']
  #allocation1 [shape = 'u32[72,128]{1,0:T(1,128)}', space=vmem, size = 0x9000, scoped, tag = 'internal scratch']
  #allocation2 [shape = 'bf16[2,64,256]{2,1,0:T(8,128)(2,1)}', space=vmem, size = 0x10000, scoped, tag = 'scratch operand']
  %s0 = inlined_call_operand.hbm [shape: bf16[2,128,256], index: 0, kind: input, shape index: {}]
  %s1 = inlined_call_operand.hbm [shape: bf16[256,1536], index: 1, kind: input, shape index: {}]
  %s2 = inlined_call_operand.hbm [shape: bf16[512,256], index: 2, kind: input, shape index: {}]
  %s3 = inlined_call_operand.hbm [shape: f32[128,128], index: 3, kind: input, shape index: {}]
  %s4 = inlined_call_operand.hbm [shape: f32[128,128], index: 4, kind: input, shape index: {}]
  %s5 = inlined_call_operand.hbm [shape: f32[2,128,256], index: 5, kind: output, shape index: {}]
  %s6 = sld [smem:[#allocation0]]
  $region84: #{tpu_custom_call.1} parent=0
    _
  %s8 = ssub.s32 1, %s6
  %s9 = scalar_select 0, %s8, %s6
  $region1: #{tpu_custom_call.1} parent=0
    #allocation3 [shape = 'u8[131072]{0}', space=vmem, size = 0x20000, scoped, tag = 'input window, operand 0']
    #allocation4 [shape = 's32[2]{0}', space=sflag, size = 0x8, scoped, tag = 'scoped memory for tpu_custom_call.1']
    #allocation5 [shape = 's32[2]{0}', space=sflag, size = 0x8, scoped, tag = 'scoped memory for tpu_custom_call.1']
    #allocation6 [shape = 'u8[786432]{0}', space=vmem, size = 0xc0000, scoped, tag = 'input window, operand 1']
    #allocation7 [shape = 's32[2]{0}', space=sflag, size = 0x8, scoped, tag = 'scoped memory for tpu_custom_call.1']
    #allocation8 [shape = 'u8[262144]{0}', space=vmem, size = 0x40000, scoped, tag = 'input window, operand 2, single buffered']
    #allocation9 [shape = 'u8[65536]{0}', space=vmem, size = 0x10000, scoped, tag = 'input window, operand 3, single buffered']
    #allocation10 [shape = 's32[1]{0}', space=sflag, size = 0x4, scoped, tag = 'scoped memory for tpu_custom_call.1']
    #allocation11 [shape = 'u8[65536]{0}', space=vmem, size = 0x10000, scoped, tag = 'input window, operand 4, single buffered']
    #allocation12 [shape = 'u8[131072]{0}', space=vmem, size = 0x20000, scoped, tag = 'output window, operand 0']
    %10 = vsyncpa [#allocation4], 0
    %s11 = scalar_lea.sflag [#allocation4], 1
    %12 = vsyncpa %s11, 0
    %13 = vsyncpa [#allocation7], 0
    %s14 = scalar_lea.sflag [#allocation7], 1
    %15 = vsyncpa %s14, 0
    %16 = vsyncpa [#allocation10], 0
    %17 = vsyncpa [#allocation5], 0
    %s18 = scalar_lea.sflag [#allocation5], 1
    %19 = vsyncpa %s18, 0
    loop: start=0, step=1, limit=10
    $region2: #{tpu_custom_call.1} parent=1 // loop_pre_header
      _
    $region3: #{tpu_custom_call.1} parent=1 // loop_header
      %s21 = sphi 0, %s25
      %p22 = scmp.ge.s32.totalorder %s21, 10
      %s28 = sphi 0, %s47
      %s29 = sphi 0, %s43
      %s30 = sphi 0, %s39
      %s31 = sphi 0, %s28
      %s32 = sphi 0, %s29
      %s33 = sphi 0, %s30
      %s34 = sphi 0, %s31
      %s35 = sphi 0, %s32
      %s36 = sphi 0, %s33
      %s50 = sphi 0, %s52
      %s53 = sphi 0, %s50
      %s54 = sphi 0, %s53
      %s70 = sphi 0, %s54
      %s76 = sphi 0, %s78
      %s79 = sphi 0, %s76
      %s80 = sphi 0, %s79
      %s96 = sphi 0, %s80
      %s100 = sphi 0, %s100
      %s102 = sphi 0, %s100
      %s103 = sphi 0, %s102
      %s117 = sphi 0, %s103
      %s121 = sphi 0, %s121
      %s123 = sphi 0, %s121
      %s124 = sphi 0, %s123
      %s138 = sphi 0, %s124
      %s142 = sphi 0, %s142
      %s144 = sphi 0, %s142
      %s145 = sphi 0, %s144
      %s159 = sphi 0, %s145
      %s167 = sphi 0, %s169
      %s170 = sphi 0, %s167
      %s171 = sphi 0, %s170
      %s187 = sphi 0, %s171
    $region4: #{tpu_custom_call.1} parent=1 // loop_header_branch
      %24 = sbr.rel (%p22) target = $region8
    $region5: #{tpu_custom_call.1} parent=1 // loop_body
      %s26 = ssub.s32 %s21, 1
      %s27 = ssub.s32 %s21, 2
      %s37 = sadd.s32 1, %s30
      %p38 = scmp.ge.s32.totalorder %s37, 2
      %s39 = scalar_select %p38, 0, %s37
      %s40 = sadd.s32 1, %s29
      %s41 = scalar_select %p38, %s40, %s29
      %p42 = scmp.ge.s32.totalorder %s41, 2
      %s43 = scalar_select %p42, 0, %s41
      %s44 = sadd.s32 1, %s28
      %s45 = scalar_select %p42, %s44, %s28
      %p46 = scmp.ge.s32.totalorder %s45, 2
      %s47 = scalar_select %p46, 0, %s45
      %s48 = ssub.s32 %s28, %s47
      %p49 = scmp.eq.s32.totalorder %s48, 0
      %s51 = sadd.s32 %s50, 1
      %s52 = scalar_select %p49, %s50, %s51
      %p55 = pneg %p49
      %p56 = scmp.eq.s32.totalorder %s21, 7
      %p57 = por %p55, %p56
      %p58 = scmp.ne.s32.totalorder %s50, %s53
      %p59 = scmp.eq.s32.totalorder %s21, 0
      %p60 = por %p58, %p59
      %p61 = scmp.ne.s32.totalorder %s50, %s53
      %p62 = scmp.eq.s32.totalorder %s26, 7
      %p63 = por %p61, %p62
      %p64 = scmp.ne.s32.totalorder %s53, %s54
      %p65 = scmp.eq.s32.totalorder %s26, 0
      %p66 = por %p64, %p65
      %p67 = scmp.ne.s32.totalorder %s53, %s54
      %p68 = scmp.eq.s32.totalorder %s27, 7
      %p69 = por %p67, %p68
      %p71 = scmp.ne.s32.totalorder %s54, %s70
      %p72 = scmp.eq.s32.totalorder %s27, 0
      %p73 = por %p71, %p72
      %s74 = ssub.s32 %s30, %s39
      %p75 = scmp.eq.s32.totalorder %s74, 0
      %s77 = sadd.s32 %s76, 1
      %s78 = scalar_select %p75, %s76, %s77
      %p81 = pneg %p75
      %p82 = scmp.eq.s32.totalorder %s21, 7
      %p83 = por %p81, %p82
      %p84 = scmp.ne.s32.totalorder %s76, %s79
      %p85 = scmp.eq.s32.totalorder %s21, 0
      %p86 = por %p84, %p85
      %p87 = scmp.ne.s32.totalorder %s76, %s79
      %p88 = scmp.eq.s32.totalorder %s26, 7
      %p89 = por %p87, %p88
      %p90 = scmp.ne.s32.totalorder %s79, %s80
      %p91 = scmp.eq.s32.totalorder %s26, 0
      %p92 = por %p90, %p91
      %p93 = scmp.ne.s32.totalorder %s79, %s80
      %p94 = scmp.eq.s32.totalorder %s27, 7
      %p95 = por %p93, %p94
      %p97 = scmp.ne.s32.totalorder %s80, %s96
      %p98 = scmp.eq.s32.totalorder %s27, 0
      %p99 = por %p97, %p98
      %s101 = sadd.s32 %s100, 1
      %p104 = scmp.eq.s32.totalorder %s21, 7
      %p105 = scmp.ne.s32.totalorder %s100, %s102
      %p106 = scmp.eq.s32.totalorder %s21, 0
      %p107 = por %p105, %p106
      %p108 = scmp.ne.s32.totalorder %s100, %s102
      %p109 = scmp.eq.s32.totalorder %s26, 7
      %p110 = por %p108, %p109
      %p111 = scmp.ne.s32.totalorder %s102, %s103
      %p112 = scmp.eq.s32.totalorder %s26, 0
      %p113 = por %p111, %p112
      %p114 = scmp.ne.s32.totalorder %s102, %s103
      %p115 = scmp.eq.s32.totalorder %s27, 7
      %p116 = por %p114, %p115
      %p118 = scmp.ne.s32.totalorder %s103, %s117
      %p119 = scmp.eq.s32.totalorder %s27, 0
      %p120 = por %p118, %p119
      %s122 = sadd.s32 %s121, 1
      %p125 = scmp.eq.s32.totalorder %s21, 7
      %p126 = scmp.ne.s32.totalorder %s121, %s123
      %p127 = scmp.eq.s32.totalorder %s21, 0
      %p128 = por %p126, %p127
      %p129 = scmp.ne.s32.totalorder %s121, %s123
      %p130 = scmp.eq.s32.totalorder %s26, 7
      %p131 = por %p129, %p130
      %p132 = scmp.ne.s32.totalorder %s123, %s124
      %p133 = scmp.eq.s32.totalorder %s26, 0
      %p134 = por %p132, %p133
      %p135 = scmp.ne.s32.totalorder %s123, %s124
      %p136 = scmp.eq.s32.totalorder %s27, 7
      %p137 = por %p135, %p136
      %p139 = scmp.ne.s32.totalorder %s124, %s138
      %p140 = scmp.eq.s32.totalorder %s27, 0
      %p141 = por %p139, %p140
      %s143 = sadd.s32 %s142, 1
      %p146 = scmp.eq.s32.totalorder %s21, 7
      %p147 = scmp.ne.s32.totalorder %s142, %s144
      %p148 = scmp.eq.s32.totalorder %s21, 0
      %p149 = por %p147, %p148
      %p150 = scmp.ne.s32.totalorder %s142, %s144
      %p151 = scmp.eq.s32.totalorder %s26, 7
      %p152 = por %p150, %p151
      %p153 = scmp.ne.s32.totalorder %s144, %s145
      %p154 = scmp.eq.s32.totalorder %s26, 0
      %p155 = por %p153, %p154
      %p156 = scmp.ne.s32.totalorder %s144, %s145
      %p157 = scmp.eq.s32.totalorder %s27, 7
      %p158 = por %p156, %p157
      %p160 = scmp.ne.s32.totalorder %s145, %s159
      %p161 = scmp.eq.s32.totalorder %s27, 0
      %p162 = por %p160, %p161
      %s163 = ssub.s32 %s28, %s47
      %s164 = ssub.s32 %s29, %s43
      %s165 = sor.u32 %s163, %s164
      %p166 = scmp.eq.s32.totalorder %s165, 0
      %s168 = sadd.s32 %s167, 1
      %s169 = scalar_select %p166, %s167, %s168
      %p172 = pneg %p166
      %p173 = scmp.eq.s32.totalorder %s21, 7
      %p174 = por %p172, %p173
      %p175 = scmp.ne.s32.totalorder %s167, %s170
      %p176 = scmp.eq.s32.totalorder %s21, 0
      %p177 = por %p175, %p176
      %p178 = scmp.ne.s32.totalorder %s167, %s170
      %p179 = scmp.eq.s32.totalorder %s26, 7
      %p180 = por %p178, %p179
      %p181 = scmp.ne.s32.totalorder %s170, %s171
      %p182 = scmp.eq.s32.totalorder %s26, 0
      %p183 = por %p181, %p182
      %p184 = scmp.ne.s32.totalorder %s170, %s171
      %p185 = scmp.eq.s32.totalorder %s27, 7
      %p186 = por %p184, %p185
      %p188 = scmp.ne.s32.totalorder %s171, %s187
      %p189 = scmp.eq.s32.totalorder %s27, 0
      %p190 = por %p188, %p189
      %p191 = scmp.le.s32.totalorder 1, %s21
      %p192 = scmp.lt.s32.totalorder %s21, 9
      %p193 = pnand %p191, %p192
      %p194 = pneg %p193
      // Predicated region
      $region9: #{tpu_custom_call.1} parent=5 // pred_check
        _
      $region10: #{tpu_custom_call.1} parent=5 // pred_check_branch
        %196 = sbr.rel (%p193) target = $region12
      $region11: #{tpu_custom_call.1} parent=5 // pred_region
        %s197 = ssub.s32 %s21, 1
        // Predicated region
        $region13: #{tpu_custom_call.1} parent=11 // pred_check
          %p198 = pneg %p113
        $region14: #{tpu_custom_call.1} parent=11 // pred_check_branch
          %200 = sbr.rel (%p198) target = $region16
        $region15: #{tpu_custom_call.1} parent=11 // pred_region
          %202 = vsyncadd [#allocation7], 0
          %s203 = sshll.u32 %s2, 4
          %s204 = int_to_ptr.hbm [resolvable:$true] %s203
          %s205 = sshll.u32 [#allocation8], 4
          %s206 = int_to_ptr.vmem [resolvable:$true] %s205
          %211 = dma.hbm_to_vmem [thread:$0]  %s204, 8192, %s206, [#allocation7], 128, 128, 8
        $region16: #{tpu_custom_call.1} parent=11 // pred_fallthru
          _
        // Predicated region
        $region17: #{tpu_custom_call.1} parent=11 // pred_check
          %p212 = pneg %p134
        $region18: #{tpu_custom_call.1} parent=11 // pred_check_branch
          %214 = sbr.rel (%p212) target = $region20
        $region19: #{tpu_custom_call.1} parent=11 // pred_region
          %216 = vsyncadd [#allocation10], 0
          %s217 = sshll.u32 %s3, 4
          %s218 = int_to_ptr.hbm [resolvable:$true] %s217
          %s219 = sshll.u32 [#allocation9], 4
          %s220 = int_to_ptr.vmem [resolvable:$true] %s219
          %225 = dma.hbm_to_vmem [thread:$0]  %s218, 2048, %s220, [#allocation10], 128, 128, 8
        $region20: #{tpu_custom_call.1} parent=11 // pred_fallthru
          _
        // Predicated region
        $region21: #{tpu_custom_call.1} parent=11 // pred_check
          %p226 = pneg %p155
        $region22: #{tpu_custom_call.1} parent=11 // pred_check_branch
          %228 = sbr.rel (%p226) target = $region24
        $region23: #{tpu_custom_call.1} parent=11 // pred_region
          %230 = vsyncadd [#allocation10], 0
          %s231 = sshll.u32 %s4, 4
          %s232 = int_to_ptr.hbm [resolvable:$true] %s231
          %s233 = sshll.u32 [#allocation11], 4
          %s234 = int_to_ptr.vmem [resolvable:$true] %s233
          %239 = dma.hbm_to_vmem [thread:$0]  %s232, 2048, %s234, [#allocation10], 128, 128, 8
        $region24: #{tpu_custom_call.1} parent=11 // pred_fallthru
          _
      $region12: #{tpu_custom_call.1} parent=5 // pred_fallthru
        _
      %p240 = scmp.lt.s32.totalorder %s21, 8
      // Predicated region
      $region25: #{tpu_custom_call.1} parent=5 // pred_check
        %p241 = pneg %p240
      $region26: #{tpu_custom_call.1} parent=5 // pred_check_branch
        %243 = sbr.rel (%p241) target = $region28
      $region27: #{tpu_custom_call.1} parent=5 // pred_region
        // Predicated region
        $region29: #{tpu_custom_call.1} parent=27 // pred_check
          %p244 = pneg %p60
        $region30: #{tpu_custom_call.1} parent=27 // pred_check_branch
          %246 = sbr.rel (%p244) target = $region32
        $region31: #{tpu_custom_call.1} parent=27 // pred_region
          %s247 = sand.u32 %s50, 1
          %s248 = scalar_lea.sflag [#allocation4], %s247
          %s249 = sand.u32 %s50, 1
          %s250 = smul.addr %s249, 128
          %s251 = scalar_lea.vmem [#allocation3], %s250
          %253 = vsyncadd %s248, 0
          %s254 = smul.addr %s28, 32
          %s255 = smul.addr %s254, 4
          %s256 = scalar_lea.hbm %s0, %s255
          %s257 = sshll.u32 %s256, 4
          %s258 = int_to_ptr.hbm [resolvable:$true] %s257
          %s259 = sshll.u32 %s251, 4
          %s260 = int_to_ptr.vmem [resolvable:$true] %s259
          %265 = dma.hbm_to_vmem [thread:$0]  %s258, 2048, %s260, %s248, 128, 128, 8
        $region32: #{tpu_custom_call.1} parent=27 // pred_fallthru
          _
        // Predicated region
        $region33: #{tpu_custom_call.1} parent=27 // pred_check
          %p266 = pneg %p86
        $region34: #{tpu_custom_call.1} parent=27 // pred_check_branch
          %268 = sbr.rel (%p266) target = $region36
        $region35: #{tpu_custom_call.1} parent=27 // pred_region
          %s269 = sand.u32 %s21, 1
          %s270 = scalar_lea.sflag [#allocation7], %s269
          %s271 = sand.u32 %s76, 1
          %s272 = smul.addr %s271, 768
          %s273 = scalar_lea.vmem [#allocation6], %s272
          %s274 = smul.u32 6, %s30
          %276 = vsyncadd %s270, 0
          %s277 = smul.addr %s274, 4
          %s278 = scalar_lea.hbm %s1, %s277
          %s279 = sshll.u32 %s278, 4
          %s280 = int_to_ptr.hbm [resolvable:$true] %s279
          %s281 = sshll.u32 %s273, 4
          %s282 = int_to_ptr.vmem [resolvable:$true] %s281
          %287 = dma.hbm_to_vmem [thread:$0]  %s280, 12288, %s282, %s270, 768, 384, 24
        $region36: #{tpu_custom_call.1} parent=27 // pred_fallthru
          _
      $region28: #{tpu_custom_call.1} parent=5 // pred_fallthru
        _
      %p288 = scmp.le.s32.totalorder 1, %s21
      %p289 = scmp.lt.s32.totalorder %s21, 9
      %p290 = pnand %p288, %p289
      %p291 = pneg %p290
      // Predicated region
      $region37: #{tpu_custom_call.1} parent=5 // pred_check
        _
      $region38: #{tpu_custom_call.1} parent=5 // pred_check_branch
        %293 = sbr.rel (%p290) target = $region40
      $region39: #{tpu_custom_call.1} parent=5 // pred_region
        %s294 = ssub.s32 %s21, 1
        %s295 = sand.u32 %s53, 1
        %s296 = scalar_lea.sflag [#allocation4], %s295
        %s297 = sand.u32 %s53, 1
        %s298 = smul.addr %s297, 128
        %s299 = scalar_lea.vmem [#allocation3], %s298
        // Predicated region
        $region41: #{tpu_custom_call.1} parent=39 // pred_check
          %p300 = pneg %p66
        $region42: #{tpu_custom_call.1} parent=39 // pred_check_branch
          %302 = sbr.rel (%p300) target = $region44
        $region43: #{tpu_custom_call.1} parent=39 // pred_region
          %304 = dma.done %s296, 2048
        $region44: #{tpu_custom_call.1} parent=39 // pred_fallthru
          _
        %s305 = sand.u32 %s26, 1
        %s306 = scalar_lea.sflag [#allocation7], %s305
        %s307 = sand.u32 %s79, 1
        %s308 = smul.addr %s307, 768
        %s309 = scalar_lea.vmem [#allocation6], %s308
        // Predicated region
        $region45: #{tpu_custom_call.1} parent=39 // pred_check
          %p310 = pneg %p92
        $region46: #{tpu_custom_call.1} parent=39 // pred_check_branch
          %312 = sbr.rel (%p310) target = $region48
        $region47: #{tpu_custom_call.1} parent=39 // pred_region
          %314 = dma.done %s306, 12288
        $region48: #{tpu_custom_call.1} parent=39 // pred_fallthru
          _
        // Predicated region
        $region49: #{tpu_custom_call.1} parent=39 // pred_check
          %p315 = pneg %p113
        $region50: #{tpu_custom_call.1} parent=39 // pred_check_branch
          %317 = sbr.rel (%p315) target = $region52
        $region51: #{tpu_custom_call.1} parent=39 // pred_region
          %319 = dma.done [#allocation7], 8192
        $region52: #{tpu_custom_call.1} parent=39 // pred_fallthru
          _
        // Predicated region
        $region53: #{tpu_custom_call.1} parent=39 // pred_check
          %p320 = pneg %p134
        $region54: #{tpu_custom_call.1} parent=39 // pred_check_branch
          %322 = sbr.rel (%p320) target = $region56
        $region55: #{tpu_custom_call.1} parent=39 // pred_region
          %324 = dma.done [#allocation10], 2048
        $region56: #{tpu_custom_call.1} parent=39 // pred_fallthru
          _
        // Predicated region
        $region57: #{tpu_custom_call.1} parent=39 // pred_check
          %p325 = pneg %p155
        $region58: #{tpu_custom_call.1} parent=39 // pred_check_branch
          %327 = sbr.rel (%p325) target = $region60
        $region59: #{tpu_custom_call.1} parent=39 // pred_region
          %329 = dma.done [#allocation10], 2048
        $region60: #{tpu_custom_call.1} parent=39 // pred_fallthru
          _
        %s330 = sand.u32 %s53, 1
        %s331 = scalar_lea.sflag [#allocation4], %s330
        %s332 = sand.u32 %s53, 1
        %s333 = smul.addr %s332, 128
        %s334 = scalar_lea.vmem [#allocation3], %s333
        %p335 = pneg %p66
        %p336 = pneg %p63
        %s337 = sand.u32 %s26, 1
        %s338 = scalar_lea.sflag [#allocation7], %s337
        %s339 = sand.u32 %s79, 1
        %s340 = smul.addr %s339, 768
        %s341 = scalar_lea.vmem [#allocation6], %s340
        %p342 = pneg %p92
        %p343 = pneg %p89
        %p344 = pneg %p113
        %p345 = pneg %p110
        %p346 = pneg %p134
        %p347 = pneg %p131
        %p348 = pneg %p155
        %p349 = pneg %p152
        %p350 = pneg %p183
        %p351 = pneg %p180
        %s352 = sand.u32 %s170, 1
        %s353 = scalar_lea.sflag [#allocation5], %s352
        %s354 = sand.u32 %s170, 1
        %s355 = smul.addr %s354, 128
        %s356 = scalar_lea.vmem [#allocation12], %s355
        %s357 = smul.u32 6, %s33
        %s358 = smul.u32 8, %s32
        %v360 = vld [vmem:[%s309] sm:$0xff]
        %v361 = vld [vmem:[%s309 + $0x8] sm:$0xff]
        %v362 = vld [vmem:[%s309 + $0x10] sm:$0xff]
        %v363 = vld [vmem:[%s309 + $0x18] sm:$0xff]
        %v364 = vld [vmem:[%s309 + $0x20] sm:$0xff]
        %v365 = vld [vmem:[%s309 + $0x28] sm:$0xff]
        %v366 = vld [vmem:[%s309 + $0x30] sm:$0xff]
        %v367 = vld [vmem:[%s309 + $0x38] sm:$0xff]
        %v368 = vld [vmem:[%s309 + $0x40] sm:$0xff]
        %v369 = vld [vmem:[%s309 + $0x48] sm:$0xff]
        %v370 = vld [vmem:[%s309 + $0x50] sm:$0xff]
        %v371 = vld [vmem:[%s309 + $0x58] sm:$0xff]
        %v372 = vld [vmem:[%s309 + $0x60] sm:$0xff]
        %v373 = vld [vmem:[%s309 + $0x68] sm:$0xff]
        %v374 = vld [vmem:[%s309 + $0x70] sm:$0xff]
        %v375 = vld [vmem:[%s309 + $0x78] sm:$0xff]
        %v376 = vld [vmem:[%s309 + $0x80] sm:$0xff]
        %v377 = vld [vmem:[%s309 + $0x88] sm:$0xff]
        %v378 = vld [vmem:[%s309 + $0x90] sm:$0xff]
        %v379 = vld [vmem:[%s309 + $0x98] sm:$0xff]
        %v380 = vld [vmem:[%s309 + $0xa0] sm:$0xff]
        %v381 = vld [vmem:[%s309 + $0xa8] sm:$0xff]
        %v382 = vld [vmem:[%s309 + $0xb0] sm:$0xff]
        %v383 = vld [vmem:[%s309 + $0xb8] sm:$0xff]
        %v384 = vld [vmem:[%s309 + $0xc0] sm:$0xff]
        %v385 = vld [vmem:[%s309 + $0xc8] sm:$0xff]
        %v386 = vld [vmem:[%s309 + $0xd0] sm:$0xff]
        %v387 = vld [vmem:[%s309 + $0xd8] sm:$0xff]
        %v388 = vld [vmem:[%s309 + $0xe0] sm:$0xff]
        %v389 = vld [vmem:[%s309 + $0xe8] sm:$0xff]
        %v390 = vld [vmem:[%s309 + $0xf0] sm:$0xff]
        %v391 = vld [vmem:[%s309 + $0xf8] sm:$0xff]
        %v392 = vld [vmem:[%s309 + $0x100] sm:$0xff]
        %v393 = vld [vmem:[%s309 + $0x108] sm:$0xff]
        %v394 = vld [vmem:[%s309 + $0x110] sm:$0xff]
        %v395 = vld [vmem:[%s309 + $0x118] sm:$0xff]
        %v396 = vld [vmem:[%s309 + $0x120] sm:$0xff]
        %v397 = vld [vmem:[%s309 + $0x128] sm:$0xff]
        %v398 = vld [vmem:[%s309 + $0x130] sm:$0xff]
        %v399 = vld [vmem:[%s309 + $0x138] sm:$0xff]
        %v400 = vld [vmem:[%s309 + $0x140] sm:$0xff]
        %v401 = vld [vmem:[%s309 + $0x148] sm:$0xff]
        %v402 = vld [vmem:[%s309 + $0x150] sm:$0xff]
        %v403 = vld [vmem:[%s309 + $0x158] sm:$0xff]
        %v404 = vld [vmem:[%s309 + $0x160] sm:$0xff]
        %v405 = vld [vmem:[%s309 + $0x168] sm:$0xff]
        %v406 = vld [vmem:[%s309 + $0x170] sm:$0xff]
        %v407 = vld [vmem:[%s309 + $0x178] sm:$0xff]
        %v408 = vld [vmem:[%s309 + $0x180] sm:$0xff]
        %v409 = vld [vmem:[%s309 + $0x188] sm:$0xff]
        %v410 = vld [vmem:[%s309 + $0x190] sm:$0xff]
        %v411 = vld [vmem:[%s309 + $0x198] sm:$0xff]
        %v412 = vld [vmem:[%s309 + $0x1a0] sm:$0xff]
        %v413 = vld [vmem:[%s309 + $0x1a8] sm:$0xff]
        %v414 = vld [vmem:[%s309 + $0x1b0] sm:$0xff]
        %v415 = vld [vmem:[%s309 + $0x1b8] sm:$0xff]
        %v416 = vld [vmem:[%s309 + $0x1c0] sm:$0xff]
        %v417 = vld [vmem:[%s309 + $0x1c8] sm:$0xff]
        %v418 = vld [vmem:[%s309 + $0x1d0] sm:$0xff]
        %v419 = vld [vmem:[%s309 + $0x1d8] sm:$0xff]
        %v420 = vld [vmem:[%s309 + $0x1e0] sm:$0xff]
        %v421 = vld [vmem:[%s309 + $0x1e8] sm:$0xff]
        %v422 = vld [vmem:[%s309 + $0x1f0] sm:$0xff]
        %v423 = vld [vmem:[%s309 + $0x1f8] sm:$0xff]
        %v424 = vld [vmem:[%s309 + $0x200] sm:$0xff]
        %v425 = vld [vmem:[%s309 + $0x208] sm:$0xff]
        %v426 = vld [vmem:[%s309 + $0x210] sm:$0xff]
        %v427 = vld [vmem:[%s309 + $0x218] sm:$0xff]
        %v428 = vld [vmem:[%s309 + $0x220] sm:$0xff]
        %v429 = vld [vmem:[%s309 + $0x228] sm:$0xff]
        %v430 = vld [vmem:[%s309 + $0x230] sm:$0xff]
        %v431 = vld [vmem:[%s309 + $0x238] sm:$0xff]
        %v432 = vld [vmem:[%s309 + $0x240] sm:$0xff]
        %v433 = vld [vmem:[%s309 + $0x248] sm:$0xff]
        %v434 = vld [vmem:[%s309 + $0x250] sm:$0xff]
        %v435 = vld [vmem:[%s309 + $0x258] sm:$0xff]
        %v436 = vld [vmem:[%s309 + $0x260] sm:$0xff]
        %v437 = vld [vmem:[%s309 + $0x268] sm:$0xff]
        %v438 = vld [vmem:[%s309 + $0x270] sm:$0xff]
        %v439 = vld [vmem:[%s309 + $0x278] sm:$0xff]
        %v440 = vld [vmem:[%s309 + $0x280] sm:$0xff]
        %v441 = vld [vmem:[%s309 + $0x288] sm:$0xff]
        %v442 = vld [vmem:[%s309 + $0x290] sm:$0xff]
        %v443 = vld [vmem:[%s309 + $0x298] sm:$0xff]
        %v444 = vld [vmem:[%s309 + $0x2a0] sm:$0xff]
        %v445 = vld [vmem:[%s309 + $0x2a8] sm:$0xff]
        %v446 = vld [vmem:[%s309 + $0x2b0] sm:$0xff]
        %v447 = vld [vmem:[%s309 + $0x2b8] sm:$0xff]
        %v448 = vld [vmem:[%s309 + $0x2c0] sm:$0xff]
        %v449 = vld [vmem:[%s309 + $0x2c8] sm:$0xff]
        %v450 = vld [vmem:[%s309 + $0x2d0] sm:$0xff]
        %v451 = vld [vmem:[%s309 + $0x2d8] sm:$0xff]
        %v452 = vld [vmem:[%s309 + $0x2e0] sm:$0xff]
        %v453 = vld [vmem:[%s309 + $0x2e8] sm:$0xff]
        %v454 = vld [vmem:[%s309 + $0x2f0] sm:$0xff]
        %v455 = vld [vmem:[%s309 + $0x2f8] sm:$0xff]
        %s456 = smul.u32 %s32, 64
        %s457 = sshra.s32 %s456, 3
        %s458 = sand.u32 %s456, 7
        %s459 = smul.u32 %s457, 2
        %s460 = smul.addr %s459, 4
        %s461 = scalar_lea.vmem %s299, %s460 [#allocation3]
        %v462 = vld [vmem:[%s461] sm:$0xff]
        %v463 = vld [vmem:[%s461 + $0x8] sm:$0xff]
        %v464 = vld [vmem:[%s461 + $0x10] sm:$0xff]
        %v465 = vld [vmem:[%s461 + $0x18] sm:$0xff]
        %v466 = vld [vmem:[%s461 + $0x20] sm:$0xff]
        %v467 = vld [vmem:[%s461 + $0x28] sm:$0xff]
        %v468 = vld [vmem:[%s461 + $0x30] sm:$0xff]
        %v469 = vld [vmem:[%s461 + $0x38] sm:$0xff]
        %s470 = scalar_lea.vmem [#allocation9], %s456
        %v471 = vld [vmem:[%s470] sm:$0xff]
        %v472 = vld [vmem:[%s470 + $0x8] sm:$0xff]
        %v473 = vld [vmem:[%s470 + $0x10] sm:$0xff]
        %v474 = vld [vmem:[%s470 + $0x18] sm:$0xff]
        %v475 = vld [vmem:[%s470 + $0x20] sm:$0xff]
        %v476 = vld [vmem:[%s470 + $0x28] sm:$0xff]
        %v477 = vld [vmem:[%s470 + $0x30] sm:$0xff]
        %v478 = vld [vmem:[%s470 + $0x38] sm:$0xff]
        %s479 = scalar_lea.vmem [#allocation11], %s456
        %v480 = vld [vmem:[%s479] sm:$0xff]
        %v481 = vld [vmem:[%s479 + $0x8] sm:$0xff]
        %v482 = vld [vmem:[%s479 + $0x10] sm:$0xff]
        %v483 = vld [vmem:[%s479 + $0x18] sm:$0xff]
        %v484 = vld [vmem:[%s479 + $0x20] sm:$0xff]
        %v485 = vld [vmem:[%s479 + $0x28] sm:$0xff]
        %v486 = vld [vmem:[%s479 + $0x30] sm:$0xff]
        %v487 = vld [vmem:[%s479 + $0x38] sm:$0xff]
        %v496 = vunpack.c.l.b16 %v462
        %v497 = vunpack.c.h.b16 %v462
        %v498 = vunpack.c.l.b16 %v463
        %v499 = vunpack.c.h.b16 %v463
        %v500 = vunpack.c.l.b16 %v464
        %v501 = vunpack.c.h.b16 %v464
        %v502 = vunpack.c.l.b16 %v465
        %v503 = vunpack.c.h.b16 %v465
        %v504 = vunpack.c.l.b16 %v466
        %v505 = vunpack.c.h.b16 %v466
        %v506 = vunpack.c.l.b16 %v467
        %v507 = vunpack.c.h.b16 %v467
        %v508 = vunpack.c.l.b16 %v468
        %v509 = vunpack.c.h.b16 %v468
        %v510 = vunpack.c.l.b16 %v469
        %v511 = vunpack.c.h.b16 %v469
        %v512 = vpack.c.b16 %v498, %v496
        %v513 = vpack.c.b16 %v499, %v497
        %v514 = vpack.c.b16 %v502, %v500
        %v515 = vpack.c.b16 %v503, %v501
        %v516 = vpack.c.b16 %v506, %v504
        %v517 = vpack.c.b16 %v507, %v505
        %v518 = vpack.c.b16 %v510, %v508
        %v519 = vpack.c.b16 %v511, %v509
        %v560 = vunpack.c.l.b16 %v360
        %v561 = vunpack.c.h.b16 %v360
        %v562 = vunpack.c.l.b16 %v363
        %v563 = vunpack.c.h.b16 %v363
        %v564 = vunpack.c.l.b16 %v366
        %v565 = vunpack.c.h.b16 %v366
        %v566 = vunpack.c.l.b16 %v369
        %v567 = vunpack.c.h.b16 %v369
        %v568 = vunpack.c.l.b16 %v372
        %v569 = vunpack.c.h.b16 %v372
        %v570 = vunpack.c.l.b16 %v375
        %v571 = vunpack.c.h.b16 %v375
        %v572 = vunpack.c.l.b16 %v378
        %v573 = vunpack.c.h.b16 %v378
        %v574 = vunpack.c.l.b16 %v381
        %v575 = vunpack.c.h.b16 %v381
        %v576 = vunpack.c.l.b16 %v384
        %v577 = vunpack.c.h.b16 %v384
        %v578 = vunpack.c.l.b16 %v387
        %v579 = vunpack.c.h.b16 %v387
        %v580 = vunpack.c.l.b16 %v390
        %v581 = vunpack.c.h.b16 %v390
        %v582 = vunpack.c.l.b16 %v393
        %v583 = vunpack.c.h.b16 %v393
        %v584 = vunpack.c.l.b16 %v396
        %v585 = vunpack.c.h.b16 %v396
        %v586 = vunpack.c.l.b16 %v399
        %v587 = vunpack.c.h.b16 %v399
        %v588 = vunpack.c.l.b16 %v402
        %v589 = vunpack.c.h.b16 %v402
        %v590 = vunpack.c.l.b16 %v405
        %v591 = vunpack.c.h.b16 %v405
        %v592 = vunpack.c.l.b16 %v408
        %v593 = vunpack.c.h.b16 %v408
        %v594 = vunpack.c.l.b16 %v411
        %v595 = vunpack.c.h.b16 %v411
        %v596 = vunpack.c.l.b16 %v414
        %v597 = vunpack.c.h.b16 %v414
        %v598 = vunpack.c.l.b16 %v417
        %v599 = vunpack.c.h.b16 %v417
        %v600 = vunpack.c.l.b16 %v420
        %v601 = vunpack.c.h.b16 %v420
        %v602 = vunpack.c.l.b16 %v423
        %v603 = vunpack.c.h.b16 %v423
        %v604 = vunpack.c.l.b16 %v426
        %v605 = vunpack.c.h.b16 %v426
        %v606 = vunpack.c.l.b16 %v429
        %v607 = vunpack.c.h.b16 %v429
        %v608 = vunpack.c.l.b16 %v432
        %v609 = vunpack.c.h.b16 %v432
        %v610 = vunpack.c.l.b16 %v435
        %v611 = vunpack.c.h.b16 %v435
        %v612 = vunpack.c.l.b16 %v438
        %v613 = vunpack.c.h.b16 %v438
        %v614 = vunpack.c.l.b16 %v441
        %v615 = vunpack.c.h.b16 %v441
        %v616 = vunpack.c.l.b16 %v444
        %v617 = vunpack.c.h.b16 %v444
        %v618 = vunpack.c.l.b16 %v447
        %v619 = vunpack.c.h.b16 %v447
        %v620 = vunpack.c.l.b16 %v450
        %v621 = vunpack.c.h.b16 %v450
        %v622 = vunpack.c.l.b16 %v453
        %v623 = vunpack.c.h.b16 %v453
        %v624 = vpack.c.b16 %v562, %v560
        %v625 = vpack.c.b16 %v563, %v561
        %v626 = vpack.c.b16 %v566, %v564
        %v627 = vpack.c.b16 %v567, %v565
        %v628 = vpack.c.b16 %v570, %v568
        %v629 = vpack.c.b16 %v571, %v569
        %v630 = vpack.c.b16 %v574, %v572
        %v631 = vpack.c.b16 %v575, %v573
        %v632 = vpack.c.b16 %v578, %v576
        %v633 = vpack.c.b16 %v579, %v577
        %v634 = vpack.c.b16 %v582, %v580
        %v635 = vpack.c.b16 %v583, %v581
        %v636 = vpack.c.b16 %v586, %v584
        %v637 = vpack.c.b16 %v587, %v585
        %v638 = vpack.c.b16 %v590, %v588
        %v639 = vpack.c.b16 %v591, %v589
        %v640 = vpack.c.b16 %v594, %v592
        %v641 = vpack.c.b16 %v595, %v593
        %v642 = vpack.c.b16 %v598, %v596
        %v643 = vpack.c.b16 %v599, %v597
        %v644 = vpack.c.b16 %v602, %v600
        %v645 = vpack.c.b16 %v603, %v601
        %v646 = vpack.c.b16 %v606, %v604
        %v647 = vpack.c.b16 %v607, %v605
        %v648 = vpack.c.b16 %v610, %v608
        %v649 = vpack.c.b16 %v611, %v609
        %v650 = vpack.c.b16 %v614, %v612
        %v651 = vpack.c.b16 %v615, %v613
        %v652 = vpack.c.b16 %v618, %v616
        %v653 = vpack.c.b16 %v619, %v617
        %v654 = vpack.c.b16 %v622, %v620
        %v655 = vpack.c.b16 %v623, %v621
        %688 = vmatpush.bf16.msra.mxu0 %v638
        %689 = vmatpush.bf16.msra.mxu0 %v636
        %690 = vmatpush.bf16.msra.mxu0 %v634
        %691 = vmatpush.bf16.msra.mxu0 %v632
        %692 = vmatpush.bf16.msra.mxu0 %v630
        %693 = vmatpush.bf16.msra.mxu0 %v628
        %694 = vmatpush.bf16.msra.mxu0 %v626
        %695 = vmatpush.bf16.msra.mxu0 %v624
        %696 = vmatmul.bf16.gmra.mxu0 %v512
        %v697 = vpop.f32.mrf.mxu0
        %v698 = vadd.f32 0.0, %v697
        %v699 = vpop.f32.mrf.mxu0
        %v700 = vadd.f32 0.0, %v699
        %701 = vmatmul.bf16.gmra.mxu0 %v514
        %v702 = vpop.f32.mrf.mxu0
        %v703 = vadd.f32 0.0, %v702
        %v704 = vpop.f32.mrf.mxu0
        %v705 = vadd.f32 0.0, %v704
        %706 = vmatmul.bf16.gmra.mxu0 %v516
        %v707 = vpop.f32.mrf.mxu0
        %v708 = vadd.f32 0.0, %v707
        %v709 = vpop.f32.mrf.mxu0
        %v710 = vadd.f32 0.0, %v709
        %711 = vmatmul.bf16.gmra.mxu0 %v518
        %v712 = vpop.f32.mrf.mxu0
        %v713 = vadd.f32 0.0, %v712
        %v714 = vpop.f32.mrf.mxu0
        %v715 = vadd.f32 0.0, %v714
        %716 = vdwg.mxu0
        %717 = vmatpush.bf16.msra.mxu0 %v654
        %718 = vmatpush.bf16.msra.mxu0 %v652
        %719 = vmatpush.bf16.msra.mxu0 %v650
        %720 = vmatpush.bf16.msra.mxu0 %v648
        %721 = vmatpush.bf16.msra.mxu0 %v646
        %722 = vmatpush.bf16.msra.mxu0 %v644
        %723 = vmatpush.bf16.msra.mxu0 %v642
        %724 = vmatpush.bf16.msra.mxu0 %v640
        %725 = vmatmul.bf16.gmra.mxu0 %v513
        %v726 = vpop.f32.mrf.mxu0
        %v727 = vadd.f32 %v698, %v726
        %v728 = vpop.f32.mrf.mxu0
        %v729 = vadd.f32 %v700, %v728
        %730 = vmatmul.bf16.gmra.mxu0 %v515
        %v731 = vpop.f32.mrf.mxu0
        %v732 = vadd.f32 %v703, %v731
        %v733 = vpop.f32.mrf.mxu0
        %v734 = vadd.f32 %v705, %v733
        %735 = vmatmul.bf16.gmra.mxu0 %v517
        %v736 = vpop.f32.mrf.mxu0
        %v737 = vadd.f32 %v708, %v736
        %v738 = vpop.f32.mrf.mxu0
        %v739 = vadd.f32 %v710, %v738
        %740 = vmatmul.bf16.gmra.mxu0 %v519
        %v741 = vpop.f32.mrf.mxu0
        %v742 = vadd.f32 %v713, %v741
        %v743 = vpop.f32.mrf.mxu0
        %v744 = vadd.f32 %v715, %v743
        %745 = vdwg.mxu0
        %746 = vmatpush.bf16.msra.mxu0 %v639
        %747 = vmatpush.bf16.msra.mxu0 %v637
        %748 = vmatpush.bf16.msra.mxu0 %v635
        %749 = vmatpush.bf16.msra.mxu0 %v633
        %750 = vmatpush.bf16.msra.mxu0 %v631
        %751 = vmatpush.bf16.msra.mxu0 %v629
        %752 = vmatpush.bf16.msra.mxu0 %v627
        %753 = vmatpush.bf16.msra.mxu0 %v625
        %754 = vmatmul.bf16.gmra.mxu0 %v512
        %v755 = vpop.f32.mrf.mxu0
        %v756 = vadd.f32 0.0, %v755
        %v757 = vpop.f32.mrf.mxu0
        %v758 = vadd.f32 0.0, %v757
        %759 = vmatmul.bf16.gmra.mxu0 %v514
        %v760 = vpop.f32.mrf.mxu0
        %v761 = vadd.f32 0.0, %v760
        %v762 = vpop.f32.mrf.mxu0
        %v763 = vadd.f32 0.0, %v762
        %764 = vmatmul.bf16.gmra.mxu0 %v516
        %v765 = vpop.f32.mrf.mxu0
        %v766 = vadd.f32 0.0, %v765
        %v767 = vpop.f32.mrf.mxu0
        %v768 = vadd.f32 0.0, %v767
        %769 = vmatmul.bf16.gmra.mxu0 %v518
        %v770 = vpop.f32.mrf.mxu0
        %v771 = vadd.f32 0.0, %v770
        %v772 = vpop.f32.mrf.mxu0
        %v773 = vadd.f32 0.0, %v772
        %774 = vdwg.mxu0
        %775 = vmatpush.bf16.msra.mxu0 %v655
        %776 = vmatpush.bf16.msra.mxu0 %v653
        %777 = vmatpush.bf16.msra.mxu0 %v651
        %778 = vmatpush.bf16.msra.mxu0 %v649
        %779 = vmatpush.bf16.msra.mxu0 %v647
        %780 = vmatpush.bf16.msra.mxu0 %v645
        %781 = vmatpush.bf16.msra.mxu0 %v643
        %782 = vmatpush.bf16.msra.mxu0 %v641
        %783 = vmatmul.bf16.gmra.mxu0 %v513
        %v784 = vpop.f32.mrf.mxu0
        %v785 = vadd.f32 %v756, %v784
        %v786 = vpop.f32.mrf.mxu0
        %v787 = vadd.f32 %v758, %v786
        %788 = vmatmul.bf16.gmra.mxu0 %v515
        %v789 = vpop.f32.mrf.mxu0
        %v790 = vadd.f32 %v761, %v789
        %v791 = vpop.f32.mrf.mxu0
        %v792 = vadd.f32 %v763, %v791
        %793 = vmatmul.bf16.gmra.mxu0 %v517
        %v794 = vpop.f32.mrf.mxu0
        %v795 = vadd.f32 %v766, %v794
        %v796 = vpop.f32.mrf.mxu0
        %v797 = vadd.f32 %v768, %v796
        %798 = vmatmul.bf16.gmra.mxu0 %v519
        %v799 = vpop.f32.mrf.mxu0
        %v800 = vadd.f32 %v771, %v799
        %v801 = vpop.f32.mrf.mxu0
        %v802 = vadd.f32 %v773, %v801
        %803 = vdwg.mxu0
        %v804 = vmul.f32 %v727, 0.088388346
        %v805 = vmul.f32 %v729, 0.088388346
        %v806 = vmul.f32 %v732, 0.088388346
        %v807 = vmul.f32 %v734, 0.088388346
        %v808 = vmul.f32 %v737, 0.088388346
        %v809 = vmul.f32 %v739, 0.088388346
        %v810 = vmul.f32 %v742, 0.088388346
        %v811 = vmul.f32 %v744, 0.088388346
        %v812 = vmul.f32 %v804, %v471
        %v813 = vmul.f32 %v805, %v472
        %v814 = vmul.f32 %v806, %v473
        %v815 = vmul.f32 %v807, %v474
        %v816 = vmul.f32 %v808, %v475
        %v817 = vmul.f32 %v809, %v476
        %v818 = vmul.f32 %v810, %v477
        %v819 = vmul.f32 %v811, %v478
        %820 = vrot.lane.b32.xlu0 %v804, 64
        %v821 = vpop.permute.xlu0 %820
        %822 = vrot.lane.b32.xlu0 %v805, 64
        %v823 = vpop.permute.xlu0 %822
        %824 = vrot.lane.b32.xlu0 %v806, 64
        %v825 = vpop.permute.xlu0 %824
        %826 = vrot.lane.b32.xlu0 %v807, 64
        %v827 = vpop.permute.xlu0 %826
        %828 = vrot.lane.b32.xlu0 %v808, 64
        %v829 = vpop.permute.xlu0 %828
        %830 = vrot.lane.b32.xlu0 %v809, 64
        %v831 = vpop.permute.xlu0 %830
        %832 = vrot.lane.b32.xlu0 %v810, 64
        %v833 = vpop.permute.xlu0 %832
        %834 = vrot.lane.b32.xlu0 %v811, 64
        %v835 = vpop.permute.xlu0 %834
        %v836 = vmul.f32 %v821, %v480
        %v837 = vmul.f32 %v823, %v481
        %v838 = vmul.f32 %v825, %v482
        %v839 = vmul.f32 %v827, %v483
        %v840 = vmul.f32 %v829, %v484
        %v841 = vmul.f32 %v831, %v485
        %v842 = vmul.f32 %v833, %v486
        %v843 = vmul.f32 %v835, %v487
        %v844 = vadd.f32 %v812, %v836
        %v845 = vadd.f32 %v813, %v837
        %v846 = vadd.f32 %v814, %v838
        %v847 = vadd.f32 %v815, %v839
        %v848 = vadd.f32 %v816, %v840
        %v849 = vadd.f32 %v817, %v841
        %v850 = vadd.f32 %v818, %v842
        %v851 = vadd.f32 %v819, %v843
        %v852 = vpack.c.bf16 %v845, %v844
        %v853 = vpack.c.bf16 %v847, %v846
        %v854 = vpack.c.bf16 %v849, %v848
        %v855 = vpack.c.bf16 %v851, %v850
        %v856 = vmul.f32 %v785, 0.088388346
        %v857 = vmul.f32 %v787, 0.088388346
        %v858 = vmul.f32 %v790, 0.088388346
        %v859 = vmul.f32 %v792, 0.088388346
        %v860 = vmul.f32 %v795, 0.088388346
        %v861 = vmul.f32 %v797, 0.088388346
        %v862 = vmul.f32 %v800, 0.088388346
        %v863 = vmul.f32 %v802, 0.088388346
        %v864 = vmul.f32 %v856, %v471
        %v865 = vmul.f32 %v857, %v472
        %v866 = vmul.f32 %v858, %v473
        %v867 = vmul.f32 %v859, %v474
        %v868 = vmul.f32 %v860, %v475
        %v869 = vmul.f32 %v861, %v476
        %v870 = vmul.f32 %v862, %v477
        %v871 = vmul.f32 %v863, %v478
        %872 = vrot.lane.b32.xlu0 %v856, 64
        %v873 = vpop.permute.xlu0 %872
        %874 = vrot.lane.b32.xlu0 %v857, 64
        %v875 = vpop.permute.xlu0 %874
        %876 = vrot.lane.b32.xlu0 %v858, 64
        %v877 = vpop.permute.xlu0 %876
        %878 = vrot.lane.b32.xlu0 %v859, 64
        %v879 = vpop.permute.xlu0 %878
        %880 = vrot.lane.b32.xlu0 %v860, 64
        %v881 = vpop.permute.xlu0 %880
        %882 = vrot.lane.b32.xlu0 %v861, 64
        %v883 = vpop.permute.xlu0 %882
        %884 = vrot.lane.b32.xlu0 %v862, 64
        %v885 = vpop.permute.xlu0 %884
        %886 = vrot.lane.b32.xlu0 %v863, 64
        %v887 = vpop.permute.xlu0 %886
        %v888 = vmul.f32 %v873, %v480
        %v889 = vmul.f32 %v875, %v481
        %v890 = vmul.f32 %v877, %v482
        %v891 = vmul.f32 %v879, %v483
        %v892 = vmul.f32 %v881, %v484
        %v893 = vmul.f32 %v883, %v485
        %v894 = vmul.f32 %v885, %v486
        %v895 = vmul.f32 %v887, %v487
        %v896 = vadd.f32 %v864, %v888
        %v897 = vadd.f32 %v865, %v889
        %v898 = vadd.f32 %v866, %v890
        %v899 = vadd.f32 %v867, %v891
        %v900 = vadd.f32 %v868, %v892
        %v901 = vadd.f32 %v869, %v893
        %v902 = vadd.f32 %v870, %v894
        %v903 = vadd.f32 %v871, %v895
        %v904 = vpack.c.bf16 %v897, %v896
        %v905 = vpack.c.bf16 %v899, %v898
        %v906 = vpack.c.bf16 %v901, %v900
        %v907 = vpack.c.bf16 %v903, %v902
        %v908 = vlaneseq
        %v909 = vshrl.u32 %v908, 7
        %v910 = vadd.s32 %v909, 8
        %v911 = vadd.s32 %v909, 16
        %v912 = vadd.s32 %v909, 24
        %v913 = vadd.s32 %v909, 32
        %v914 = vadd.s32 %v909, 40
        %v915 = vadd.s32 %v909, 48
        %v916 = vadd.s32 %v909, 56
        %v917 = vstv %s456
        %v918 = vadd.s32 %v917, %v909
        %v919 = vadd.s32 %v917, %v910
        %v920 = vadd.s32 %v917, %v911
        %v921 = vadd.s32 %v917, %v912
        %v922 = vadd.s32 %v917, %v913
        %v923 = vadd.s32 %v917, %v914
        %v924 = vadd.s32 %v917, %v915
        %v925 = vadd.s32 %v917, %v916
        %s926 = sadd.s32 %s32, 1
        // While loop
        $region61: #{tpu_custom_call.1} parent=39 // loop_pre_header
          _
        $region62: #{tpu_custom_call.1} parent=39 // loop_header
          %s928 = sphi 0, %s930
          %p929 = scmp.ge.s32.totalorder %s928, %s926
          %v933 = vphi -1e+30, %v1727
          %v934 = vphi -1e+30, %v1728
          %v935 = vphi -1e+30, %v1729
          %v936 = vphi -1e+30, %v1730
          %v937 = vphi -1e+30, %v1731
          %v938 = vphi -1e+30, %v1732
          %v939 = vphi -1e+30, %v1733
          %v940 = vphi -1e+30, %v1734
          %v941 = vphi 0.0, %v1815
          %v942 = vphi 0.0, %v1816
          %v943 = vphi 0.0, %v1817
          %v944 = vphi 0.0, %v1818
          %v945 = vphi 0.0, %v1819
          %v946 = vphi 0.0, %v1820
          %v947 = vphi 0.0, %v1821
          %v948 = vphi 0.0, %v1822
          %v949 = vphi 0.0, %v1876
          %v950 = vphi 0.0, %v1877
          %v951 = vphi 0.0, %v1878
          %v952 = vphi 0.0, %v1879
          %v953 = vphi 0.0, %v1880
          %v954 = vphi 0.0, %v1881
          %v955 = vphi 0.0, %v1882
          %v956 = vphi 0.0, %v1883
          %v957 = vphi -1e+30, %v1993
          %v958 = vphi -1e+30, %v1994
          %v959 = vphi -1e+30, %v1995
          %v960 = vphi -1e+30, %v1996
          %v961 = vphi -1e+30, %v1997
          %v962 = vphi -1e+30, %v1998
          %v963 = vphi -1e+30, %v1999
          %v964 = vphi -1e+30, %v2000
          %v965 = vphi 0.0, %v2081
          %v966 = vphi 0.0, %v2082
          %v967 = vphi 0.0, %v2083
          %v968 = vphi 0.0, %v2084
          %v969 = vphi 0.0, %v2085
          %v970 = vphi 0.0, %v2086
          %v971 = vphi 0.0, %v2087
          %v972 = vphi 0.0, %v2088
          %v973 = vphi 0.0, %v2142
          %v974 = vphi 0.0, %v2143
          %v975 = vphi 0.0, %v2144
          %v976 = vphi 0.0, %v2145
          %v977 = vphi 0.0, %v2146
          %v978 = vphi 0.0, %v2147
          %v979 = vphi 0.0, %v2148
          %v980 = vphi 0.0, %v2149
        $region63: #{tpu_custom_call.1} parent=39 // loop_header_branch
          %932 = sbr.rel (%p929) target = $region67
        $region64: #{tpu_custom_call.1} parent=39 // loop_body
          %s981 = smul.u32 %s928, 64
          %s982 = sshra.s32 %s981, 3
          %s983 = sand.u32 %s981, 7
          %s984 = smul.u32 %s982, 2
          %s985 = smul.addr %s984, 4
          %s986 = scalar_lea.vmem %s299, %s985 [#allocation3]
          %v987 = vld [vmem:[%s986] sm:$0xff]
          %v988 = vld [vmem:[%s986 + $0x8] sm:$0xff]
          %v989 = vld [vmem:[%s986 + $0x10] sm:$0xff]
          %v990 = vld [vmem:[%s986 + $0x18] sm:$0xff]
          %v991 = vld [vmem:[%s986 + $0x20] sm:$0xff]
          %v992 = vld [vmem:[%s986 + $0x28] sm:$0xff]
          %v993 = vld [vmem:[%s986 + $0x30] sm:$0xff]
          %v994 = vld [vmem:[%s986 + $0x38] sm:$0xff]
          %v1003 = vunpack.c.l.b16 %v987
          %v1004 = vunpack.c.h.b16 %v987
          %v1005 = vunpack.c.l.b16 %v988
          %v1006 = vunpack.c.h.b16 %v988
          %v1007 = vunpack.c.l.b16 %v989
          %v1008 = vunpack.c.h.b16 %v989
          %v1009 = vunpack.c.l.b16 %v990
          %v1010 = vunpack.c.h.b16 %v990
          %v1011 = vunpack.c.l.b16 %v991
          %v1012 = vunpack.c.h.b16 %v991
          %v1013 = vunpack.c.l.b16 %v992
          %v1014 = vunpack.c.h.b16 %v992
          %v1015 = vunpack.c.l.b16 %v993
          %v1016 = vunpack.c.h.b16 %v993
          %v1017 = vunpack.c.l.b16 %v994
          %v1018 = vunpack.c.h.b16 %v994
          %v1019 = vpack.c.b16 %v1005, %v1003
          %v1020 = vpack.c.b16 %v1006, %v1004
          %v1021 = vpack.c.b16 %v1009, %v1007
          %v1022 = vpack.c.b16 %v1010, %v1008
          %v1023 = vpack.c.b16 %v1013, %v1011
          %v1024 = vpack.c.b16 %v1014, %v1012
          %v1025 = vpack.c.b16 %v1017, %v1015
          %v1026 = vpack.c.b16 %v1018, %v1016
          %v1099 = vunpack.c.l.b16 %v361
          %v1100 = vunpack.c.h.b16 %v361
          %v1101 = vunpack.c.l.b16 %v362
          %v1102 = vunpack.c.h.b16 %v362
          %v1103 = vunpack.c.l.b16 %v364
          %v1104 = vunpack.c.h.b16 %v364
          %v1105 = vunpack.c.l.b16 %v365
          %v1106 = vunpack.c.h.b16 %v365
          %v1107 = vunpack.c.l.b16 %v367
          %v1108 = vunpack.c.h.b16 %v367
          %v1109 = vunpack.c.l.b16 %v368
          %v1110 = vunpack.c.h.b16 %v368
          %v1111 = vunpack.c.l.b16 %v370
          %v1112 = vunpack.c.h.b16 %v370
          %v1113 = vunpack.c.l.b16 %v371
          %v1114 = vunpack.c.h.b16 %v371
          %v1115 = vunpack.c.l.b16 %v373
          %v1116 = vunpack.c.h.b16 %v373
          %v1117 = vunpack.c.l.b16 %v374
          %v1118 = vunpack.c.h.b16 %v374
          %v1119 = vunpack.c.l.b16 %v376
          %v1120 = vunpack.c.h.b16 %v376
          %v1121 = vunpack.c.l.b16 %v377
          %v1122 = vunpack.c.h.b16 %v377
          %v1123 = vunpack.c.l.b16 %v379
          %v1124 = vunpack.c.h.b16 %v379
          %v1125 = vunpack.c.l.b16 %v380
          %v1126 = vunpack.c.h.b16 %v380
          %v1127 = vunpack.c.l.b16 %v382
          %v1128 = vunpack.c.h.b16 %v382
          %v1129 = vunpack.c.l.b16 %v383
          %v1130 = vunpack.c.h.b16 %v383
          %v1131 = vunpack.c.l.b16 %v385
          %v1132 = vunpack.c.h.b16 %v385
          %v1133 = vunpack.c.l.b16 %v386
          %v1134 = vunpack.c.h.b16 %v386
          %v1135 = vunpack.c.l.b16 %v388
          %v1136 = vunpack.c.h.b16 %v388
          %v1137 = vunpack.c.l.b16 %v389
          %v1138 = vunpack.c.h.b16 %v389
          %v1139 = vunpack.c.l.b16 %v391
          %v1140 = vunpack.c.h.b16 %v391
          %v1141 = vunpack.c.l.b16 %v392
          %v1142 = vunpack.c.h.b16 %v392
          %v1143 = vunpack.c.l.b16 %v394
          %v1144 = vunpack.c.h.b16 %v394
          %v1145 = vunpack.c.l.b16 %v395
          %v1146 = vunpack.c.h.b16 %v395
          %v1147 = vunpack.c.l.b16 %v397
          %v1148 = vunpack.c.h.b16 %v397
          %v1149 = vunpack.c.l.b16 %v398
          %v1150 = vunpack.c.h.b16 %v398
          %v1151 = vunpack.c.l.b16 %v400
          %v1152 = vunpack.c.h.b16 %v400
          %v1153 = vunpack.c.l.b16 %v401
          %v1154 = vunpack.c.h.b16 %v401
          %v1155 = vunpack.c.l.b16 %v403
          %v1156 = vunpack.c.h.b16 %v403
          %v1157 = vunpack.c.l.b16 %v404
          %v1158 = vunpack.c.h.b16 %v404
          %v1159 = vunpack.c.l.b16 %v406
          %v1160 = vunpack.c.h.b16 %v406
          %v1161 = vunpack.c.l.b16 %v407
          %v1162 = vunpack.c.h.b16 %v407
          %v1163 = vunpack.c.l.b16 %v409
          %v1164 = vunpack.c.h.b16 %v409
          %v1165 = vunpack.c.l.b16 %v410
          %v1166 = vunpack.c.h.b16 %v410
          %v1167 = vunpack.c.l.b16 %v412
          %v1168 = vunpack.c.h.b16 %v412
          %v1169 = vunpack.c.l.b16 %v413
          %v1170 = vunpack.c.h.b16 %v413
          %v1171 = vunpack.c.l.b16 %v415
          %v1172 = vunpack.c.h.b16 %v415
          %v1173 = vunpack.c.l.b16 %v416
          %v1174 = vunpack.c.h.b16 %v416
          %v1175 = vunpack.c.l.b16 %v418
          %v1176 = vunpack.c.h.b16 %v418
          %v1177 = vunpack.c.l.b16 %v419
          %v1178 = vunpack.c.h.b16 %v419
          %v1179 = vunpack.c.l.b16 %v421
          %v1180 = vunpack.c.h.b16 %v421
          %v1181 = vunpack.c.l.b16 %v422
          %v1182 = vunpack.c.h.b16 %v422
          %v1183 = vunpack.c.l.b16 %v424
          %v1184 = vunpack.c.h.b16 %v424
          %v1185 = vunpack.c.l.b16 %v425
          %v1186 = vunpack.c.h.b16 %v425
          %v1187 = vunpack.c.l.b16 %v427
          %v1188 = vunpack.c.h.b16 %v427
          %v1189 = vunpack.c.l.b16 %v428
          %v1190 = vunpack.c.h.b16 %v428
          %v1191 = vunpack.c.l.b16 %v430
          %v1192 = vunpack.c.h.b16 %v430
          %v1193 = vunpack.c.l.b16 %v431
          %v1194 = vunpack.c.h.b16 %v431
          %v1195 = vunpack.c.l.b16 %v433
          %v1196 = vunpack.c.h.b16 %v433
          %v1197 = vunpack.c.l.b16 %v434
          %v1198 = vunpack.c.h.b16 %v434
          %v1199 = vunpack.c.l.b16 %v436
          %v1200 = vunpack.c.h.b16 %v436
          %v1201 = vunpack.c.l.b16 %v437
          %v1202 = vunpack.c.h.b16 %v437
          %v1203 = vunpack.c.l.b16 %v439
          %v1204 = vunpack.c.h.b16 %v439
          %v1205 = vunpack.c.l.b16 %v440
          %v1206 = vunpack.c.h.b16 %v440
          %v1207 = vunpack.c.l.b16 %v442
          %v1208 = vunpack.c.h.b16 %v442
          %v1209 = vunpack.c.l.b16 %v443
          %v1210 = vunpack.c.h.b16 %v443
          %v1211 = vunpack.c.l.b16 %v445
          %v1212 = vunpack.c.h.b16 %v445
          %v1213 = vunpack.c.l.b16 %v446
          %v1214 = vunpack.c.h.b16 %v446
          %v1215 = vunpack.c.l.b16 %v448
          %v1216 = vunpack.c.h.b16 %v448
          %v1217 = vunpack.c.l.b16 %v449
          %v1218 = vunpack.c.h.b16 %v449
          %v1219 = vunpack.c.l.b16 %v451
          %v1220 = vunpack.c.h.b16 %v451
          %v1221 = vunpack.c.l.b16 %v452
          %v1222 = vunpack.c.h.b16 %v452
          %v1223 = vunpack.c.l.b16 %v454
          %v1224 = vunpack.c.h.b16 %v454
          %v1225 = vunpack.c.l.b16 %v455
          %v1226 = vunpack.c.h.b16 %v455
          %v1227 = vpack.c.b16 %v1103, %v1099
          %v1228 = vpack.c.b16 %v1104, %v1100
          %v1229 = vpack.c.b16 %v1105, %v1101
          %v1230 = vpack.c.b16 %v1106, %v1102
          %v1231 = vpack.c.b16 %v1111, %v1107
          %v1232 = vpack.c.b16 %v1112, %v1108
          %v1233 = vpack.c.b16 %v1113, %v1109
          %v1234 = vpack.c.b16 %v1114, %v1110
          %v1235 = vpack.c.b16 %v1119, %v1115
          %v1236 = vpack.c.b16 %v1120, %v1116
          %v1237 = vpack.c.b16 %v1121, %v1117
          %v1238 = vpack.c.b16 %v1122, %v1118
          %v1239 = vpack.c.b16 %v1127, %v1123
          %v1240 = vpack.c.b16 %v1128, %v1124
          %v1241 = vpack.c.b16 %v1129, %v1125
          %v1242 = vpack.c.b16 %v1130, %v1126
          %v1243 = vpack.c.b16 %v1135, %v1131
          %v1244 = vpack.c.b16 %v1136, %v1132
          %v1245 = vpack.c.b16 %v1137, %v1133
          %v1246 = vpack.c.b16 %v1138, %v1134
          %v1247 = vpack.c.b16 %v1143, %v1139
          %v1248 = vpack.c.b16 %v1144, %v1140
          %v1249 = vpack.c.b16 %v1145, %v1141
          %v1250 = vpack.c.b16 %v1146, %v1142
          %v1251 = vpack.c.b16 %v1151, %v1147
          %v1252 = vpack.c.b16 %v1152, %v1148
          %v1253 = vpack.c.b16 %v1153, %v1149
          %v1254 = vpack.c.b16 %v1154, %v1150
          %v1255 = vpack.c.b16 %v1159, %v1155
          %v1256 = vpack.c.b16 %v1160, %v1156
          %v1257 = vpack.c.b16 %v1161, %v1157
          %v1258 = vpack.c.b16 %v1162, %v1158
          %v1259 = vpack.c.b16 %v1167, %v1163
          %v1260 = vpack.c.b16 %v1168, %v1164
          %v1261 = vpack.c.b16 %v1169, %v1165
          %v1262 = vpack.c.b16 %v1170, %v1166
          %v1263 = vpack.c.b16 %v1175, %v1171
          %v1264 = vpack.c.b16 %v1176, %v1172
          %v1265 = vpack.c.b16 %v1177, %v1173
          %v1266 = vpack.c.b16 %v1178, %v1174
          %v1267 = vpack.c.b16 %v1183, %v1179
          %v1268 = vpack.c.b16 %v1184, %v1180
          %v1269 = vpack.c.b16 %v1185, %v1181
          %v1270 = vpack.c.b16 %v1186, %v1182
          %v1271 = vpack.c.b16 %v1191, %v1187
          %v1272 = vpack.c.b16 %v1192, %v1188
          %v1273 = vpack.c.b16 %v1193, %v1189
          %v1274 = vpack.c.b16 %v1194, %v1190
          %v1275 = vpack.c.b16 %v1199, %v1195
          %v1276 = vpack.c.b16 %v1200, %v1196
          %v1277 = vpack.c.b16 %v1201, %v1197
          %v1278 = vpack.c.b16 %v1202, %v1198
          %v1279 = vpack.c.b16 %v1207, %v1203
          %v1280 = vpack.c.b16 %v1208, %v1204
          %v1281 = vpack.c.b16 %v1209, %v1205
          %v1282 = vpack.c.b16 %v1210, %v1206
          %v1283 = vpack.c.b16 %v1215, %v1211
          %v1284 = vpack.c.b16 %v1216, %v1212
          %v1285 = vpack.c.b16 %v1217, %v1213
          %v1286 = vpack.c.b16 %v1218, %v1214
          %v1287 = vpack.c.b16 %v1223, %v1219
          %v1288 = vpack.c.b16 %v1224, %v1220
          %v1289 = vpack.c.b16 %v1225, %v1221
          %v1290 = vpack.c.b16 %v1226, %v1222
          %1355 = vmatpush.bf16.msra.mxu0 %v1255
          %1356 = vmatpush.bf16.msra.mxu0 %v1251
          %1357 = vmatpush.bf16.msra.mxu0 %v1247
          %1358 = vmatpush.bf16.msra.mxu0 %v1243
          %1359 = vmatpush.bf16.msra.mxu0 %v1239
          %1360 = vmatpush.bf16.msra.mxu0 %v1235
          %1361 = vmatpush.bf16.msra.mxu0 %v1231
          %1362 = vmatpush.bf16.msra.mxu0 %v1227
          %1363 = vmatmul.bf16.gmra.mxu0 %v1019
          %v1364 = vpop.f32.mrf.mxu0
          %v1365 = vadd.f32 0.0, %v1364
          %v1366 = vpop.f32.mrf.mxu0
          %v1367 = vadd.f32 0.0, %v1366
          %1368 = vmatmul.bf16.gmra.mxu0 %v1021
          %v1369 = vpop.f32.mrf.mxu0
          %v1370 = vadd.f32 0.0, %v1369
          %v1371 = vpop.f32.mrf.mxu0
          %v1372 = vadd.f32 0.0, %v1371
          %1373 = vmatmul.bf16.gmra.mxu0 %v1023
          %v1374 = vpop.f32.mrf.mxu0
          %v1375 = vadd.f32 0.0, %v1374
          %v1376 = vpop.f32.mrf.mxu0
          %v1377 = vadd.f32 0.0, %v1376
          %1378 = vmatmul.bf16.gmra.mxu0 %v1025
          %v1379 = vpop.f32.mrf.mxu0
          %v1380 = vadd.f32 0.0, %v1379
          %v1381 = vpop.f32.mrf.mxu0
          %v1382 = vadd.f32 0.0, %v1381
          %1383 = vdwg.mxu0
          %1384 = vmatpush.bf16.msra.mxu0 %v1287
          %1385 = vmatpush.bf16.msra.mxu0 %v1283
          %1386 = vmatpush.bf16.msra.mxu0 %v1279
          %1387 = vmatpush.bf16.msra.mxu0 %v1275
          %1388 = vmatpush.bf16.msra.mxu0 %v1271
          %1389 = vmatpush.bf16.msra.mxu0 %v1267
          %1390 = vmatpush.bf16.msra.mxu0 %v1263
          %1391 = vmatpush.bf16.msra.mxu0 %v1259
          %1392 = vmatmul.bf16.gmra.mxu0 %v1020
          %v1393 = vpop.f32.mrf.mxu0
          %v1394 = vadd.f32 %v1365, %v1393
          %v1395 = vpop.f32.mrf.mxu0
          %v1396 = vadd.f32 %v1367, %v1395
          %1397 = vmatmul.bf16.gmra.mxu0 %v1022
          %v1398 = vpop.f32.mrf.mxu0
          %v1399 = vadd.f32 %v1370, %v1398
          %v1400 = vpop.f32.mrf.mxu0
          %v1401 = vadd.f32 %v1372, %v1400
          %1402 = vmatmul.bf16.gmra.mxu0 %v1024
          %v1403 = vpop.f32.mrf.mxu0
          %v1404 = vadd.f32 %v1375, %v1403
          %v1405 = vpop.f32.mrf.mxu0
          %v1406 = vadd.f32 %v1377, %v1405
          %1407 = vmatmul.bf16.gmra.mxu0 %v1026
          %v1408 = vpop.f32.mrf.mxu0
          %v1409 = vadd.f32 %v1380, %v1408
          %v1410 = vpop.f32.mrf.mxu0
          %v1411 = vadd.f32 %v1382, %v1410
          %1412 = vdwg.mxu0
          %1413 = vmatpush.bf16.msra.mxu0 %v1256
          %1414 = vmatpush.bf16.msra.mxu0 %v1252
          %1415 = vmatpush.bf16.msra.mxu0 %v1248
          %1416 = vmatpush.bf16.msra.mxu0 %v1244
          %1417 = vmatpush.bf16.msra.mxu0 %v1240
          %1418 = vmatpush.bf16.msra.mxu0 %v1236
          %1419 = vmatpush.bf16.msra.mxu0 %v1232
          %1420 = vmatpush.bf16.msra.mxu0 %v1228
          %1421 = vmatmul.bf16.gmra.mxu0 %v1019
          %v1422 = vpop.f32.mrf.mxu0
          %v1423 = vadd.f32 0.0, %v1422
          %v1424 = vpop.f32.mrf.mxu0
          %v1425 = vadd.f32 0.0, %v1424
          %1426 = vmatmul.bf16.gmra.mxu0 %v1021
          %v1427 = vpop.f32.mrf.mxu0
          %v1428 = vadd.f32 0.0, %v1427
          %v1429 = vpop.f32.mrf.mxu0
          %v1430 = vadd.f32 0.0, %v1429
          %1431 = vmatmul.bf16.gmra.mxu0 %v1023
          %v1432 = vpop.f32.mrf.mxu0
          %v1433 = vadd.f32 0.0, %v1432
          %v1434 = vpop.f32.mrf.mxu0
          %v1435 = vadd.f32 0.0, %v1434
          %1436 = vmatmul.bf16.gmra.mxu0 %v1025
          %v1437 = vpop.f32.mrf.mxu0
          %v1438 = vadd.f32 0.0, %v1437
          %v1439 = vpop.f32.mrf.mxu0
          %v1440 = vadd.f32 0.0, %v1439
          %1441 = vdwg.mxu0
          %1442 = vmatpush.bf16.msra.mxu0 %v1288
          %1443 = vmatpush.bf16.msra.mxu0 %v1284
          %1444 = vmatpush.bf16.msra.mxu0 %v1280
          %1445 = vmatpush.bf16.msra.mxu0 %v1276
          %1446 = vmatpush.bf16.msra.mxu0 %v1272
          %1447 = vmatpush.bf16.msra.mxu0 %v1268
          %1448 = vmatpush.bf16.msra.mxu0 %v1264
          %1449 = vmatpush.bf16.msra.mxu0 %v1260
          %1450 = vmatmul.bf16.gmra.mxu0 %v1020
          %v1451 = vpop.f32.mrf.mxu0
          %v1452 = vadd.f32 %v1423, %v1451
          %v1453 = vpop.f32.mrf.mxu0
          %v1454 = vadd.f32 %v1425, %v1453
          %1455 = vmatmul.bf16.gmra.mxu0 %v1022
          %v1456 = vpop.f32.mrf.mxu0
          %v1457 = vadd.f32 %v1428, %v1456
          %v1458 = vpop.f32.mrf.mxu0
          %v1459 = vadd.f32 %v1430, %v1458
          %1460 = vmatmul.bf16.gmra.mxu0 %v1024
          %v1461 = vpop.f32.mrf.mxu0
          %v1462 = vadd.f32 %v1433, %v1461
          %v1463 = vpop.f32.mrf.mxu0
          %v1464 = vadd.f32 %v1435, %v1463
          %1465 = vmatmul.bf16.gmra.mxu0 %v1026
          %v1466 = vpop.f32.mrf.mxu0
          %v1467 = vadd.f32 %v1438, %v1466
          %v1468 = vpop.f32.mrf.mxu0
          %v1469 = vadd.f32 %v1440, %v1468
          %1470 = vdwg.mxu0
          %1471 = vmatpush.bf16.msra.mxu0 %v1257
          %1472 = vmatpush.bf16.msra.mxu0 %v1253
          %1473 = vmatpush.bf16.msra.mxu0 %v1249
          %1474 = vmatpush.bf16.msra.mxu0 %v1245
          %1475 = vmatpush.bf16.msra.mxu0 %v1241
          %1476 = vmatpush.bf16.msra.mxu0 %v1237
          %1477 = vmatpush.bf16.msra.mxu0 %v1233
          %1478 = vmatpush.bf16.msra.mxu0 %v1229
          %1479 = vmatmul.bf16.gmra.mxu0 %v1019
          %v1480 = vpop.f32.mrf.mxu0
          %v1481 = vadd.f32 0.0, %v1480
          %v1482 = vpop.f32.mrf.mxu0
          %v1483 = vadd.f32 0.0, %v1482
          %1484 = vmatmul.bf16.gmra.mxu0 %v1021
          %v1485 = vpop.f32.mrf.mxu0
          %v1486 = vadd.f32 0.0, %v1485
          %v1487 = vpop.f32.mrf.mxu0
          %v1488 = vadd.f32 0.0, %v1487
          %1489 = vmatmul.bf16.gmra.mxu0 %v1023
          %v1490 = vpop.f32.mrf.mxu0
          %v1491 = vadd.f32 0.0, %v1490
          %v1492 = vpop.f32.mrf.mxu0
          %v1493 = vadd.f32 0.0, %v1492
          %1494 = vmatmul.bf16.gmra.mxu0 %v1025
          %v1495 = vpop.f32.mrf.mxu0
          %v1496 = vadd.f32 0.0, %v1495
          %v1497 = vpop.f32.mrf.mxu0
          %v1498 = vadd.f32 0.0, %v1497
          %1499 = vdwg.mxu0
          %1500 = vmatpush.bf16.msra.mxu0 %v1289
          %1501 = vmatpush.bf16.msra.mxu0 %v1285
          %1502 = vmatpush.bf16.msra.mxu0 %v1281
          %1503 = vmatpush.bf16.msra.mxu0 %v1277
          %1504 = vmatpush.bf16.msra.mxu0 %v1273
          %1505 = vmatpush.bf16.msra.mxu0 %v1269
          %1506 = vmatpush.bf16.msra.mxu0 %v1265
          %1507 = vmatpush.bf16.msra.mxu0 %v1261
          %1508 = vmatmul.bf16.gmra.mxu0 %v1020
          %v1509 = vpop.f32.mrf.mxu0
          %v1510 = vadd.f32 %v1481, %v1509
          %v1511 = vpop.f32.mrf.mxu0
          %v1512 = vadd.f32 %v1483, %v1511
          %1513 = vmatmul.bf16.gmra.mxu0 %v1022
          %v1514 = vpop.f32.mrf.mxu0
          %v1515 = vadd.f32 %v1486, %v1514
          %v1516 = vpop.f32.mrf.mxu0
          %v1517 = vadd.f32 %v1488, %v1516
          %1518 = vmatmul.bf16.gmra.mxu0 %v1024
          %v1519 = vpop.f32.mrf.mxu0
          %v1520 = vadd.f32 %v1491, %v1519
          %v1521 = vpop.f32.mrf.mxu0
          %v1522 = vadd.f32 %v1493, %v1521
          %1523 = vmatmul.bf16.gmra.mxu0 %v1026
          %v1524 = vpop.f32.mrf.mxu0
          %v1525 = vadd.f32 %v1496, %v1524
          %v1526 = vpop.f32.mrf.mxu0
          %v1527 = vadd.f32 %v1498, %v1526
          %1528 = vdwg.mxu0
          %1529 = vmatpush.bf16.msra.mxu0 %v1258
          %1530 = vmatpush.bf16.msra.mxu0 %v1254
          %1531 = vmatpush.bf16.msra.mxu0 %v1250
          %1532 = vmatpush.bf16.msra.mxu0 %v1246
          %1533 = vmatpush.bf16.msra.mxu0 %v1242
          %1534 = vmatpush.bf16.msra.mxu0 %v1238
          %1535 = vmatpush.bf16.msra.mxu0 %v1234
          %1536 = vmatpush.bf16.msra.mxu0 %v1230
          %1537 = vmatmul.bf16.gmra.mxu0 %v1019
          %v1538 = vpop.f32.mrf.mxu0
          %v1539 = vadd.f32 0.0, %v1538
          %v1540 = vpop.f32.mrf.mxu0
          %v1541 = vadd.f32 0.0, %v1540
          %1542 = vmatmul.bf16.gmra.mxu0 %v1021
          %v1543 = vpop.f32.mrf.mxu0
          %v1544 = vadd.f32 0.0, %v1543
          %v1545 = vpop.f32.mrf.mxu0
          %v1546 = vadd.f32 0.0, %v1545
          %1547 = vmatmul.bf16.gmra.mxu0 %v1023
          %v1548 = vpop.f32.mrf.mxu0
          %v1549 = vadd.f32 0.0, %v1548
          %v1550 = vpop.f32.mrf.mxu0
          %v1551 = vadd.f32 0.0, %v1550
          %1552 = vmatmul.bf16.gmra.mxu0 %v1025
          %v1553 = vpop.f32.mrf.mxu0
          %v1554 = vadd.f32 0.0, %v1553
          %v1555 = vpop.f32.mrf.mxu0
          %v1556 = vadd.f32 0.0, %v1555
          %1557 = vdwg.mxu0
          %1558 = vmatpush.bf16.msra.mxu0 %v1290
          %1559 = vmatpush.bf16.msra.mxu0 %v1286
          %1560 = vmatpush.bf16.msra.mxu0 %v1282
          %1561 = vmatpush.bf16.msra.mxu0 %v1278
          %1562 = vmatpush.bf16.msra.mxu0 %v1274
          %1563 = vmatpush.bf16.msra.mxu0 %v1270
          %1564 = vmatpush.bf16.msra.mxu0 %v1266
          %1565 = vmatpush.bf16.msra.mxu0 %v1262
          %1566 = vmatmul.bf16.gmra.mxu0 %v1020
          %v1567 = vpop.f32.mrf.mxu0
          %v1568 = vadd.f32 %v1539, %v1567
          %v1569 = vpop.f32.mrf.mxu0
          %v1570 = vadd.f32 %v1541, %v1569
          %1571 = vmatmul.bf16.gmra.mxu0 %v1022
          %v1572 = vpop.f32.mrf.mxu0
          %v1573 = vadd.f32 %v1544, %v1572
          %v1574 = vpop.f32.mrf.mxu0
          %v1575 = vadd.f32 %v1546, %v1574
          %1576 = vmatmul.bf16.gmra.mxu0 %v1024
          %v1577 = vpop.f32.mrf.mxu0
          %v1578 = vadd.f32 %v1549, %v1577
          %v1579 = vpop.f32.mrf.mxu0
          %v1580 = vadd.f32 %v1551, %v1579
          %1581 = vmatmul.bf16.gmra.mxu0 %v1026
          %v1582 = vpop.f32.mrf.mxu0
          %v1583 = vadd.f32 %v1554, %v1582
          %v1584 = vpop.f32.mrf.mxu0
          %v1585 = vadd.f32 %v1556, %v1584
          %1586 = vdwg.mxu0
          %s1587 = scalar_lea.vmem [#allocation9], %s981
          %v1588 = vld [vmem:[%s1587] sm:$0xff]
          %v1589 = vld [vmem:[%s1587 + $0x8] sm:$0xff]
          %v1590 = vld [vmem:[%s1587 + $0x10] sm:$0xff]
          %v1591 = vld [vmem:[%s1587 + $0x18] sm:$0xff]
          %v1592 = vld [vmem:[%s1587 + $0x20] sm:$0xff]
          %v1593 = vld [vmem:[%s1587 + $0x28] sm:$0xff]
          %v1594 = vld [vmem:[%s1587 + $0x30] sm:$0xff]
          %v1595 = vld [vmem:[%s1587 + $0x38] sm:$0xff]
          %s1596 = scalar_lea.vmem [#allocation11], %s981
          %v1597 = vld [vmem:[%s1596] sm:$0xff]
          %v1598 = vld [vmem:[%s1596 + $0x8] sm:$0xff]
          %v1599 = vld [vmem:[%s1596 + $0x10] sm:$0xff]
          %v1600 = vld [vmem:[%s1596 + $0x18] sm:$0xff]
          %v1601 = vld [vmem:[%s1596 + $0x20] sm:$0xff]
          %v1602 = vld [vmem:[%s1596 + $0x28] sm:$0xff]
          %v1603 = vld [vmem:[%s1596 + $0x30] sm:$0xff]
          %v1604 = vld [vmem:[%s1596 + $0x38] sm:$0xff]
          %v1605 = vlaneseq
          %v1606 = vand.u32 %v1605, 127
          %v1607 = vstv %s981
          %v1608 = vadd.s32 %v1607, %v1606
          %vm1609 = vcmp.gt.s32.totalorder %v1608, %v918
          %vm1610 = vcmp.gt.s32.totalorder %v1608, %v919
          %vm1611 = vcmp.gt.s32.totalorder %v1608, %v920
          %vm1612 = vcmp.gt.s32.totalorder %v1608, %v921
          %vm1613 = vcmp.gt.s32.totalorder %v1608, %v922
          %vm1614 = vcmp.gt.s32.totalorder %v1608, %v923
          %vm1615 = vcmp.gt.s32.totalorder %v1608, %v924
          %vm1616 = vcmp.gt.s32.totalorder %v1608, %v925
          %v1617 = vmul.f32 %v1394, %v1588
          %v1618 = vmul.f32 %v1396, %v1589
          %v1619 = vmul.f32 %v1399, %v1590
          %v1620 = vmul.f32 %v1401, %v1591
          %v1621 = vmul.f32 %v1404, %v1592
          %v1622 = vmul.f32 %v1406, %v1593
          %v1623 = vmul.f32 %v1409, %v1594
          %v1624 = vmul.f32 %v1411, %v1595
          %1625 = vrot.lane.b32.xlu0 %v1394, 64
          %v1626 = vpop.permute.xlu0 %1625
          %1627 = vrot.lane.b32.xlu0 %v1396, 64
          %v1628 = vpop.permute.xlu0 %1627
          %1629 = vrot.lane.b32.xlu0 %v1399, 64
          %v1630 = vpop.permute.xlu0 %1629
          %1631 = vrot.lane.b32.xlu0 %v1401, 64
          %v1632 = vpop.permute.xlu0 %1631
          %1633 = vrot.lane.b32.xlu0 %v1404, 64
          %v1634 = vpop.permute.xlu0 %1633
          %1635 = vrot.lane.b32.xlu0 %v1406, 64
          %v1636 = vpop.permute.xlu0 %1635
          %1637 = vrot.lane.b32.xlu0 %v1409, 64
          %v1638 = vpop.permute.xlu0 %1637
          %1639 = vrot.lane.b32.xlu0 %v1411, 64
          %v1640 = vpop.permute.xlu0 %1639
          %v1641 = vmul.f32 %v1626, %v1597
          %v1642 = vmul.f32 %v1628, %v1598
          %v1643 = vmul.f32 %v1630, %v1599
          %v1644 = vmul.f32 %v1632, %v1600
          %v1645 = vmul.f32 %v1634, %v1601
          %v1646 = vmul.f32 %v1636, %v1602
          %v1647 = vmul.f32 %v1638, %v1603
          %v1648 = vmul.f32 %v1640, %v1604
          %v1649 = vadd.f32 %v1617, %v1641
          %v1650 = vadd.f32 %v1618, %v1642
          %v1651 = vadd.f32 %v1619, %v1643
          %v1652 = vadd.f32 %v1620, %v1644
          %v1653 = vadd.f32 %v1621, %v1645
          %v1654 = vadd.f32 %v1622, %v1646
          %v1655 = vadd.f32 %v1623, %v1647
          %v1656 = vadd.f32 %v1624, %v1648
          %v1657 = vpack.c.bf16 %v1650, %v1649
          %v1658 = vpack.c.bf16 %v1652, %v1651
          %v1659 = vpack.c.bf16 %v1654, %v1653
          %v1660 = vpack.c.bf16 %v1656, %v1655
          %v1661 = vpack.c.bf16 %v1512, %v1510
          %v1662 = vpack.c.bf16 %v1517, %v1515
          %v1663 = vpack.c.bf16 %v1522, %v1520
          %v1664 = vpack.c.bf16 %v1527, %v1525
          %1665 = vmatpush.bf16.xpose.msra.mxu0 0
          %1666 = vmatpush.bf16.xpose.msra.mxu0 0
          %1667 = vmatpush.bf16.xpose.msra.mxu0 0
          %1668 = vmatpush.bf16.xpose.msra.mxu0 0
          %1669 = vmatpush.bf16.xpose.msra.mxu0 %v1660
          %1670 = vmatpush.bf16.xpose.msra.mxu0 %v1659
          %1671 = vmatpush.bf16.xpose.msra.mxu0 %v1658
          %1672 = vmatpush.bf16.xpose.msra.mxu0 %v1657
          %1673 = vmatmul.bf16.gmra.mxu0 %v852
          %v1674 = vpop.f32.mrf.mxu0
          %v1675 = vadd.f32 0.0, %v1674
          %v1676 = vpop.f32.mrf.mxu0
          %v1677 = vadd.f32 0.0, %v1676
          %1678 = vmatmul.bf16.gmra.mxu0 %v853
          %v1679 = vpop.f32.mrf.mxu0
          %v1680 = vadd.f32 0.0, %v1679
          %v1681 = vpop.f32.mrf.mxu0
          %v1682 = vadd.f32 0.0, %v1681
          %1683 = vmatmul.bf16.gmra.mxu0 %v854
          %v1684 = vpop.f32.mrf.mxu0
          %v1685 = vadd.f32 0.0, %v1684
          %v1686 = vpop.f32.mrf.mxu0
          %v1687 = vadd.f32 0.0, %v1686
          %1688 = vmatmul.bf16.gmra.mxu0 %v855
          %v1689 = vpop.f32.mrf.mxu0
          %v1690 = vadd.f32 0.0, %v1689
          %v1691 = vpop.f32.mrf.mxu0
          %v1692 = vadd.f32 0.0, %v1691
          %1693 = vdwg.mxu0
          %v1694 = vsel %vm1609, -1e+30, %v1675
          %v1695 = vsel %vm1610, -1e+30, %v1677
          %v1696 = vsel %vm1611, -1e+30, %v1680
          %v1697 = vsel %vm1612, -1e+30, %v1682
          %v1698 = vsel %vm1613, -1e+30, %v1685
          %v1699 = vsel %vm1614, -1e+30, %v1687
          %v1700 = vsel %vm1615, -1e+30, %v1690
          %v1701 = vsel %vm1616, -1e+30, %v1692
          %vm1702 = vcmask 523264
          %v1703 = vsel %vm1702, %v1694, -inf
          %1704 = vmax.xlane.f32.xlu0 %v1703
          %v1705 = vpop.xlane.xlu0 %1704
          %v1706 = vsel %vm1702, %v1695, -inf
          %1707 = vmax.xlane.f32.xlu0 %v1706
          %v1708 = vpop.xlane.xlu0 %1707
          %v1709 = vsel %vm1702, %v1696, -inf
          %1710 = vmax.xlane.f32.xlu0 %v1709
          %v1711 = vpop.xlane.xlu0 %1710
          %v1712 = vsel %vm1702, %v1697, -inf
          %1713 = vmax.xlane.f32.xlu0 %v1712
          %v1714 = vpop.xlane.xlu0 %1713
          %v1715 = vsel %vm1702, %v1698, -inf
          %1716 = vmax.xlane.f32.xlu0 %v1715
          %v1717 = vpop.xlane.xlu0 %1716
          %v1718 = vsel %vm1702, %v1699, -inf
          %1719 = vmax.xlane.f32.xlu0 %v1718
          %v1720 = vpop.xlane.xlu0 %1719
          %v1721 = vsel %vm1702, %v1700, -inf
          %1722 = vmax.xlane.f32.xlu0 %v1721
          %v1723 = vpop.xlane.xlu0 %1722
          %v1724 = vsel %vm1702, %v1701, -inf
          %1725 = vmax.xlane.f32.xlu0 %v1724
          %v1726 = vpop.xlane.xlu0 %1725
          %v1727 = vmax.f32 %v933, %v1705
          %v1728 = vmax.f32 %v934, %v1708
          %v1729 = vmax.f32 %v935, %v1711
          %v1730 = vmax.f32 %v936, %v1714
          %v1731 = vmax.f32 %v937, %v1717
          %v1732 = vmax.f32 %v938, %v1720
          %v1733 = vmax.f32 %v939, %v1723
          %v1734 = vmax.f32 %v940, %v1726
          %v1735 = vsub.f32 %v933, %v1727
          %v1736 = vsub.f32 %v934, %v1728
          %v1737 = vsub.f32 %v935, %v1729
          %v1738 = vsub.f32 %v936, %v1730
          %v1739 = vsub.f32 %v937, %v1731
          %v1740 = vsub.f32 %v938, %v1732
          %v1741 = vsub.f32 %v939, %v1733
          %v1742 = vsub.f32 %v940, %v1734
          %v1743 = vmul.f32 %v1735, 1.442695
          %v1744 = vpow.pop %v1743
          %v1745 = vmul.f32 %v1736, 1.442695
          %v1746 = vpow.pop %v1745
          %v1747 = vmul.f32 %v1737, 1.442695
          %v1748 = vpow.pop %v1747
          %v1749 = vmul.f32 %v1738, 1.442695
          %v1750 = vpow.pop %v1749
          %v1751 = vmul.f32 %v1739, 1.442695
          %v1752 = vpow.pop %v1751
          %v1753 = vmul.f32 %v1740, 1.442695
          %v1754 = vpow.pop %v1753
          %v1755 = vmul.f32 %v1741, 1.442695
          %v1756 = vpow.pop %v1755
          %v1757 = vmul.f32 %v1742, 1.442695
          %v1758 = vpow.pop %v1757
          %v1759 = vsub.f32 %v1694, %v1727
          %v1760 = vsub.f32 %v1695, %v1728
          %v1761 = vsub.f32 %v1696, %v1729
          %v1762 = vsub.f32 %v1697, %v1730
          %v1763 = vsub.f32 %v1698, %v1731
          %v1764 = vsub.f32 %v1699, %v1732
          %v1765 = vsub.f32 %v1700, %v1733
          %v1766 = vsub.f32 %v1701, %v1734
          %v1767 = vmul.f32 %v1759, 1.442695
          %v1768 = vpow.pop %v1767
          %v1769 = vmul.f32 %v1760, 1.442695
          %v1770 = vpow.pop %v1769
          %v1771 = vmul.f32 %v1761, 1.442695
          %v1772 = vpow.pop %v1771
          %v1773 = vmul.f32 %v1762, 1.442695
          %v1774 = vpow.pop %v1773
          %v1775 = vmul.f32 %v1763, 1.442695
          %v1776 = vpow.pop %v1775
          %v1777 = vmul.f32 %v1764, 1.442695
          %v1778 = vpow.pop %v1777
          %v1779 = vmul.f32 %v1765, 1.442695
          %v1780 = vpow.pop %v1779
          %v1781 = vmul.f32 %v1766, 1.442695
          %v1782 = vpow.pop %v1781
          %v1783 = vmul.f32 %v1744, %v941
          %v1784 = vmul.f32 %v1746, %v942
          %v1785 = vmul.f32 %v1748, %v943
          %v1786 = vmul.f32 %v1750, %v944
          %v1787 = vmul.f32 %v1752, %v945
          %v1788 = vmul.f32 %v1754, %v946
          %v1789 = vmul.f32 %v1756, %v947
          %v1790 = vmul.f32 %v1758, %v948
          %v1791 = vsel %vm1702, %v1768, 0.0
          %1792 = vadd.xlane.f32.xlu0 %v1791
          %v1793 = vpop.xlane.xlu0 %1792
          %v1794 = vsel %vm1702, %v1770, 0.0
          %1795 = vadd.xlane.f32.xlu0 %v1794
          %v1796 = vpop.xlane.xlu0 %1795
          %v1797 = vsel %vm1702, %v1772, 0.0
          %1798 = vadd.xlane.f32.xlu0 %v1797
          %v1799 = vpop.xlane.xlu0 %1798
          %v1800 = vsel %vm1702, %v1774, 0.0
          %1801 = vadd.xlane.f32.xlu0 %v1800
          %v1802 = vpop.xlane.xlu0 %1801
          %v1803 = vsel %vm1702, %v1776, 0.0
          %1804 = vadd.xlane.f32.xlu0 %v1803
          %v1805 = vpop.xlane.xlu0 %1804
          %v1806 = vsel %vm1702, %v1778, 0.0
          %1807 = vadd.xlane.f32.xlu0 %v1806
          %v1808 = vpop.xlane.xlu0 %1807
          %v1809 = vsel %vm1702, %v1780, 0.0
          %1810 = vadd.xlane.f32.xlu0 %v1809
          %v1811 = vpop.xlane.xlu0 %1810
          %v1812 = vsel %vm1702, %v1782, 0.0
          %1813 = vadd.xlane.f32.xlu0 %v1812
          %v1814 = vpop.xlane.xlu0 %1813
          %v1815 = vadd.f32 %v1783, %v1793
          %v1816 = vadd.f32 %v1784, %v1796
          %v1817 = vadd.f32 %v1785, %v1799
          %v1818 = vadd.f32 %v1786, %v1802
          %v1819 = vadd.f32 %v1787, %v1805
          %v1820 = vadd.f32 %v1788, %v1808
          %v1821 = vadd.f32 %v1789, %v1811
          %v1822 = vadd.f32 %v1790, %v1814
          %v1823 = vmul.f32 %v1744, %v949
          %v1824 = vmul.f32 %v1746, %v950
          %v1825 = vmul.f32 %v1748, %v951
          %v1826 = vmul.f32 %v1750, %v952
          %v1827 = vmul.f32 %v1752, %v953
          %v1828 = vmul.f32 %v1754, %v954
          %v1829 = vmul.f32 %v1756, %v955
          %v1830 = vmul.f32 %v1758, %v956
          %v1831 = vpack.c.bf16 %v1770, %v1768
          %v1832 = vpack.c.bf16 %v1774, %v1772
          %v1833 = vpack.c.bf16 %v1778, %v1776
          %v1834 = vpack.c.bf16 %v1782, %v1780
          %v1836 = vsel %vm1702, %v1831, 0
          %v1839 = vsel %vm1702, %v1832, 0
          %v1842 = vsel %vm1702, %v1833, 0
          %v1845 = vsel %vm1702, %v1834, 0
          %1847 = vmatpush.bf16.msra.mxu0 0
          %1848 = vmatpush.bf16.msra.mxu0 0
          %1849 = vmatpush.bf16.msra.mxu0 0
          %1850 = vmatpush.bf16.msra.mxu0 0
          %1851 = vmatpush.bf16.msra.mxu0 %v1664
          %1852 = vmatpush.bf16.msra.mxu0 %v1663
          %1853 = vmatpush.bf16.msra.mxu0 %v1662
          %1854 = vmatpush.bf16.msra.mxu0 %v1661
          %1855 = vmatmul.bf16.gmra.mxu0 %v1836
          %v1856 = vpop.f32.mrf.mxu0
          %v1857 = vadd.f32 0.0, %v1856
          %v1858 = vpop.f32.mrf.mxu0
          %v1859 = vadd.f32 0.0, %v1858
          %1860 = vmatmul.bf16.gmra.mxu0 %v1839
          %v1861 = vpop.f32.mrf.mxu0
          %v1862 = vadd.f32 0.0, %v1861
          %v1863 = vpop.f32.mrf.mxu0
          %v1864 = vadd.f32 0.0, %v1863
          %1865 = vmatmul.bf16.gmra.mxu0 %v1842
          %v1866 = vpop.f32.mrf.mxu0
          %v1867 = vadd.f32 0.0, %v1866
          %v1868 = vpop.f32.mrf.mxu0
          %v1869 = vadd.f32 0.0, %v1868
          %1870 = vmatmul.bf16.gmra.mxu0 %v1845
          %v1871 = vpop.f32.mrf.mxu0
          %v1872 = vadd.f32 0.0, %v1871
          %v1873 = vpop.f32.mrf.mxu0
          %v1874 = vadd.f32 0.0, %v1873
          %1875 = vdwg.mxu0
          %v1876 = vadd.f32 %v1823, %v1857
          %v1877 = vadd.f32 %v1824, %v1859
          %v1878 = vadd.f32 %v1825, %v1862
          %v1879 = vadd.f32 %v1826, %v1864
          %v1880 = vadd.f32 %v1827, %v1867
          %v1881 = vadd.f32 %v1828, %v1869
          %v1882 = vadd.f32 %v1829, %v1872
          %v1883 = vadd.f32 %v1830, %v1874
          %v1884 = vmul.f32 %v1452, %v1588
          %v1885 = vmul.f32 %v1454, %v1589
          %v1886 = vmul.f32 %v1457, %v1590
          %v1887 = vmul.f32 %v1459, %v1591
          %v1888 = vmul.f32 %v1462, %v1592
          %v1889 = vmul.f32 %v1464, %v1593
          %v1890 = vmul.f32 %v1467, %v1594
          %v1891 = vmul.f32 %v1469, %v1595
          %1892 = vrot.lane.b32.xlu0 %v1452, 64
          %v1893 = vpop.permute.xlu0 %1892
          %1894 = vrot.lane.b32.xlu0 %v1454, 64
          %v1895 = vpop.permute.xlu0 %1894
          %1896 = vrot.lane.b32.xlu0 %v1457, 64
          %v1897 = vpop.permute.xlu0 %1896
          %1898 = vrot.lane.b32.xlu0 %v1459, 64
          %v1899 = vpop.permute.xlu0 %1898
          %1900 = vrot.lane.b32.xlu0 %v1462, 64
          %v1901 = vpop.permute.xlu0 %1900
          %1902 = vrot.lane.b32.xlu0 %v1464, 64
          %v1903 = vpop.permute.xlu0 %1902
          %1904 = vrot.lane.b32.xlu0 %v1467, 64
          %v1905 = vpop.permute.xlu0 %1904
          %1906 = vrot.lane.b32.xlu0 %v1469, 64
          %v1907 = vpop.permute.xlu0 %1906
          %v1908 = vmul.f32 %v1893, %v1597
          %v1909 = vmul.f32 %v1895, %v1598
          %v1910 = vmul.f32 %v1897, %v1599
          %v1911 = vmul.f32 %v1899, %v1600
          %v1912 = vmul.f32 %v1901, %v1601
          %v1913 = vmul.f32 %v1903, %v1602
          %v1914 = vmul.f32 %v1905, %v1603
          %v1915 = vmul.f32 %v1907, %v1604
          %v1916 = vadd.f32 %v1884, %v1908
          %v1917 = vadd.f32 %v1885, %v1909
          %v1918 = vadd.f32 %v1886, %v1910
          %v1919 = vadd.f32 %v1887, %v1911
          %v1920 = vadd.f32 %v1888, %v1912
          %v1921 = vadd.f32 %v1889, %v1913
          %v1922 = vadd.f32 %v1890, %v1914
          %v1923 = vadd.f32 %v1891, %v1915
          %v1924 = vpack.c.bf16 %v1917, %v1916
          %v1925 = vpack.c.bf16 %v1919, %v1918
          %v1926 = vpack.c.bf16 %v1921, %v1920
          %v1927 = vpack.c.bf16 %v1923, %v1922
          %v1928 = vpack.c.bf16 %v1570, %v1568
          %v1929 = vpack.c.bf16 %v1575, %v1573
          %v1930 = vpack.c.bf16 %v1580, %v1578
          %v1931 = vpack.c.bf16 %v1585, %v1583
          %1932 = vmatpush.bf16.xpose.msra.mxu0 0
          %1933 = vmatpush.bf16.xpose.msra.mxu0 0
          %1934 = vmatpush.bf16.xpose.msra.mxu0 0
          %1935 = vmatpush.bf16.xpose.msra.mxu0 0
          %1936 = vmatpush.bf16.xpose.msra.mxu0 %v1927
          %1937 = vmatpush.bf16.xpose.msra.mxu0 %v1926
          %1938 = vmatpush.bf16.xpose.msra.mxu0 %v1925
          %1939 = vmatpush.bf16.xpose.msra.mxu0 %v1924
          %1940 = vmatmul.bf16.gmra.mxu0 %v904
          %v1941 = vpop.f32.mrf.mxu0
          %v1942 = vadd.f32 0.0, %v1941
          %v1943 = vpop.f32.mrf.mxu0
          %v1944 = vadd.f32 0.0, %v1943
          %1945 = vmatmul.bf16.gmra.mxu0 %v905
          %v1946 = vpop.f32.mrf.mxu0
          %v1947 = vadd.f32 0.0, %v1946
          %v1948 = vpop.f32.mrf.mxu0
          %v1949 = vadd.f32 0.0, %v1948
          %1950 = vmatmul.bf16.gmra.mxu0 %v906
          %v1951 = vpop.f32.mrf.mxu0
          %v1952 = vadd.f32 0.0, %v1951
          %v1953 = vpop.f32.mrf.mxu0
          %v1954 = vadd.f32 0.0, %v1953
          %1955 = vmatmul.bf16.gmra.mxu0 %v907
          %v1956 = vpop.f32.mrf.mxu0
          %v1957 = vadd.f32 0.0, %v1956
          %v1958 = vpop.f32.mrf.mxu0
          %v1959 = vadd.f32 0.0, %v1958
          %1960 = vdwg.mxu0
          %v1961 = vsel %vm1609, -1e+30, %v1942
          %v1962 = vsel %vm1610, -1e+30, %v1944
          %v1963 = vsel %vm1611, -1e+30, %v1947
          %v1964 = vsel %vm1612, -1e+30, %v1949
          %v1965 = vsel %vm1613, -1e+30, %v1952
          %v1966 = vsel %vm1614, -1e+30, %v1954
          %v1967 = vsel %vm1615, -1e+30, %v1957
          %v1968 = vsel %vm1616, -1e+30, %v1959
          %v1969 = vsel %vm1702, %v1961, -inf
          %1970 = vmax.xlane.f32.xlu0 %v1969
          %v1971 = vpop.xlane.xlu0 %1970
          %v1972 = vsel %vm1702, %v1962, -inf
          %1973 = vmax.xlane.f32.xlu0 %v1972
          %v1974 = vpop.xlane.xlu0 %1973
          %v1975 = vsel %vm1702, %v1963, -inf
          %1976 = vmax.xlane.f32.xlu0 %v1975
          %v1977 = vpop.xlane.xlu0 %1976
          %v1978 = vsel %vm1702, %v1964, -inf
          %1979 = vmax.xlane.f32.xlu0 %v1978
          %v1980 = vpop.xlane.xlu0 %1979
          %v1981 = vsel %vm1702, %v1965, -inf
          %1982 = vmax.xlane.f32.xlu0 %v1981
          %v1983 = vpop.xlane.xlu0 %1982
          %v1984 = vsel %vm1702, %v1966, -inf
          %1985 = vmax.xlane.f32.xlu0 %v1984
          %v1986 = vpop.xlane.xlu0 %1985
          %v1987 = vsel %vm1702, %v1967, -inf
          %1988 = vmax.xlane.f32.xlu0 %v1987
          %v1989 = vpop.xlane.xlu0 %1988
          %v1990 = vsel %vm1702, %v1968, -inf
          %1991 = vmax.xlane.f32.xlu0 %v1990
          %v1992 = vpop.xlane.xlu0 %1991
          %v1993 = vmax.f32 %v957, %v1971
          %v1994 = vmax.f32 %v958, %v1974
          %v1995 = vmax.f32 %v959, %v1977
          %v1996 = vmax.f32 %v960, %v1980
          %v1997 = vmax.f32 %v961, %v1983
          %v1998 = vmax.f32 %v962, %v1986
          %v1999 = vmax.f32 %v963, %v1989
          %v2000 = vmax.f32 %v964, %v1992
          %v2001 = vsub.f32 %v957, %v1993
          %v2002 = vsub.f32 %v958, %v1994
          %v2003 = vsub.f32 %v959, %v1995
          %v2004 = vsub.f32 %v960, %v1996
          %v2005 = vsub.f32 %v961, %v1997
          %v2006 = vsub.f32 %v962, %v1998
          %v2007 = vsub.f32 %v963, %v1999
          %v2008 = vsub.f32 %v964, %v2000
          %v2009 = vmul.f32 %v2001, 1.442695
          %v2010 = vpow.pop %v2009
          %v2011 = vmul.f32 %v2002, 1.442695
          %v2012 = vpow.pop %v2011
          %v2013 = vmul.f32 %v2003, 1.442695
          %v2014 = vpow.pop %v2013
          %v2015 = vmul.f32 %v2004, 1.442695
          %v2016 = vpow.pop %v2015
          %v2017 = vmul.f32 %v2005, 1.442695
          %v2018 = vpow.pop %v2017
          %v2019 = vmul.f32 %v2006, 1.442695
          %v2020 = vpow.pop %v2019
          %v2021 = vmul.f32 %v2007, 1.442695
          %v2022 = vpow.pop %v2021
          %v2023 = vmul.f32 %v2008, 1.442695
          %v2024 = vpow.pop %v2023
          %v2025 = vsub.f32 %v1961, %v1993
          %v2026 = vsub.f32 %v1962, %v1994
          %v2027 = vsub.f32 %v1963, %v1995
          %v2028 = vsub.f32 %v1964, %v1996
          %v2029 = vsub.f32 %v1965, %v1997
          %v2030 = vsub.f32 %v1966, %v1998
          %v2031 = vsub.f32 %v1967, %v1999
          %v2032 = vsub.f32 %v1968, %v2000
          %v2033 = vmul.f32 %v2025, 1.442695
          %v2034 = vpow.pop %v2033
          %v2035 = vmul.f32 %v2026, 1.442695
          %v2036 = vpow.pop %v2035
          %v2037 = vmul.f32 %v2027, 1.442695
          %v2038 = vpow.pop %v2037
          %v2039 = vmul.f32 %v2028, 1.442695
          %v2040 = vpow.pop %v2039
          %v2041 = vmul.f32 %v2029, 1.442695
          %v2042 = vpow.pop %v2041
          %v2043 = vmul.f32 %v2030, 1.442695
          %v2044 = vpow.pop %v2043
          %v2045 = vmul.f32 %v2031, 1.442695
          %v2046 = vpow.pop %v2045
          %v2047 = vmul.f32 %v2032, 1.442695
          %v2048 = vpow.pop %v2047
          %v2049 = vmul.f32 %v2010, %v965
          %v2050 = vmul.f32 %v2012, %v966
          %v2051 = vmul.f32 %v2014, %v967
          %v2052 = vmul.f32 %v2016, %v968
          %v2053 = vmul.f32 %v2018, %v969
          %v2054 = vmul.f32 %v2020, %v970
          %v2055 = vmul.f32 %v2022, %v971
          %v2056 = vmul.f32 %v2024, %v972
          %v2057 = vsel %vm1702, %v2034, 0.0
          %2058 = vadd.xlane.f32.xlu0 %v2057
          %v2059 = vpop.xlane.xlu0 %2058
          %v2060 = vsel %vm1702, %v2036, 0.0
          %2061 = vadd.xlane.f32.xlu0 %v2060
          %v2062 = vpop.xlane.xlu0 %2061
          %v2063 = vsel %vm1702, %v2038, 0.0
          %2064 = vadd.xlane.f32.xlu0 %v2063
          %v2065 = vpop.xlane.xlu0 %2064
          %v2066 = vsel %vm1702, %v2040, 0.0
          %2067 = vadd.xlane.f32.xlu0 %v2066
          %v2068 = vpop.xlane.xlu0 %2067
          %v2069 = vsel %vm1702, %v2042, 0.0
          %2070 = vadd.xlane.f32.xlu0 %v2069
          %v2071 = vpop.xlane.xlu0 %2070
          %v2072 = vsel %vm1702, %v2044, 0.0
          %2073 = vadd.xlane.f32.xlu0 %v2072
          %v2074 = vpop.xlane.xlu0 %2073
          %v2075 = vsel %vm1702, %v2046, 0.0
          %2076 = vadd.xlane.f32.xlu0 %v2075
          %v2077 = vpop.xlane.xlu0 %2076
          %v2078 = vsel %vm1702, %v2048, 0.0
          %2079 = vadd.xlane.f32.xlu0 %v2078
          %v2080 = vpop.xlane.xlu0 %2079
          %v2081 = vadd.f32 %v2049, %v2059
          %v2082 = vadd.f32 %v2050, %v2062
          %v2083 = vadd.f32 %v2051, %v2065
          %v2084 = vadd.f32 %v2052, %v2068
          %v2085 = vadd.f32 %v2053, %v2071
          %v2086 = vadd.f32 %v2054, %v2074
          %v2087 = vadd.f32 %v2055, %v2077
          %v2088 = vadd.f32 %v2056, %v2080
          %v2089 = vmul.f32 %v2010, %v973
          %v2090 = vmul.f32 %v2012, %v974
          %v2091 = vmul.f32 %v2014, %v975
          %v2092 = vmul.f32 %v2016, %v976
          %v2093 = vmul.f32 %v2018, %v977
          %v2094 = vmul.f32 %v2020, %v978
          %v2095 = vmul.f32 %v2022, %v979
          %v2096 = vmul.f32 %v2024, %v980
          %v2097 = vpack.c.bf16 %v2036, %v2034
          %v2098 = vpack.c.bf16 %v2040, %v2038
          %v2099 = vpack.c.bf16 %v2044, %v2042
          %v2100 = vpack.c.bf16 %v2048, %v2046
          %v2102 = vsel %vm1702, %v2097, 0
          %v2105 = vsel %vm1702, %v2098, 0
          %v2108 = vsel %vm1702, %v2099, 0
          %v2111 = vsel %vm1702, %v2100, 0
          %2113 = vmatpush.bf16.msra.mxu0 0
          %2114 = vmatpush.bf16.msra.mxu0 0
          %2115 = vmatpush.bf16.msra.mxu0 0
          %2116 = vmatpush.bf16.msra.mxu0 0
          %2117 = vmatpush.bf16.msra.mxu0 %v1931
          %2118 = vmatpush.bf16.msra.mxu0 %v1930
          %2119 = vmatpush.bf16.msra.mxu0 %v1929
          %2120 = vmatpush.bf16.msra.mxu0 %v1928
          %2121 = vmatmul.bf16.gmra.mxu0 %v2102
          %v2122 = vpop.f32.mrf.mxu0
          %v2123 = vadd.f32 0.0, %v2122
          %v2124 = vpop.f32.mrf.mxu0
          %v2125 = vadd.f32 0.0, %v2124
          %2126 = vmatmul.bf16.gmra.mxu0 %v2105
          %v2127 = vpop.f32.mrf.mxu0
          %v2128 = vadd.f32 0.0, %v2127
          %v2129 = vpop.f32.mrf.mxu0
          %v2130 = vadd.f32 0.0, %v2129
          %2131 = vmatmul.bf16.gmra.mxu0 %v2108
          %v2132 = vpop.f32.mrf.mxu0
          %v2133 = vadd.f32 0.0, %v2132
          %v2134 = vpop.f32.mrf.mxu0
          %v2135 = vadd.f32 0.0, %v2134
          %2136 = vmatmul.bf16.gmra.mxu0 %v2111
          %v2137 = vpop.f32.mrf.mxu0
          %v2138 = vadd.f32 0.0, %v2137
          %v2139 = vpop.f32.mrf.mxu0
          %v2140 = vadd.f32 0.0, %v2139
          %2141 = vdwg.mxu0
          %v2142 = vadd.f32 %v2089, %v2123
          %v2143 = vadd.f32 %v2090, %v2125
          %v2144 = vadd.f32 %v2091, %v2128
          %v2145 = vadd.f32 %v2092, %v2130
          %v2146 = vadd.f32 %v2093, %v2133
          %v2147 = vadd.f32 %v2094, %v2135
          %v2148 = vadd.f32 %v2095, %v2138
          %v2149 = vadd.f32 %v2096, %v2140
        $region65: #{tpu_custom_call.1} parent=39 // loop_footer
          %s930 = sadd.s32 %s928, 1
        $region66: #{tpu_custom_call.1} parent=39 // loop_footer_branch
          %927 = sbr.rel target = $region62
        $region67: #{tpu_custom_call.1} parent=39 // loop_exit
          _
        %v2150 = vrcp.pop %v941
        %v2151 = vrcp.pop %v942
        %v2152 = vrcp.pop %v943
        %v2153 = vrcp.pop %v944
        %v2154 = vrcp.pop %v945
        %v2155 = vrcp.pop %v946
        %v2156 = vrcp.pop %v947
        %v2157 = vrcp.pop %v948
        %v2158 = vmul.f32 %v949, %v2150
        %v2159 = vmul.f32 %v950, %v2151
        %v2160 = vmul.f32 %v951, %v2152
        %v2161 = vmul.f32 %v952, %v2153
        %v2162 = vmul.f32 %v953, %v2154
        %v2163 = vmul.f32 %v954, %v2155
        %v2164 = vmul.f32 %v955, %v2156
        %v2165 = vmul.f32 %v956, %v2157
        %v2166 = vpack.c.bf16 %v2158, %v2158
        %v2167 = vpack.c.bf16 %v2159, %v2159
        %v2168 = vpack.c.bf16 %v2160, %v2160
        %v2169 = vpack.c.bf16 %v2161, %v2161
        %v2170 = vpack.c.bf16 %v2162, %v2162
        %v2171 = vpack.c.bf16 %v2163, %v2163
        %v2172 = vpack.c.bf16 %v2164, %v2164
        %v2173 = vpack.c.bf16 %v2165, %v2165
        %v2174 = vrcp.pop %v965
        %v2175 = vrcp.pop %v966
        %v2176 = vrcp.pop %v967
        %v2177 = vrcp.pop %v968
        %v2178 = vrcp.pop %v969
        %v2179 = vrcp.pop %v970
        %v2180 = vrcp.pop %v971
        %v2181 = vrcp.pop %v972
        %v2182 = vmul.f32 %v973, %v2174
        %v2183 = vmul.f32 %v974, %v2175
        %v2184 = vmul.f32 %v975, %v2176
        %v2185 = vmul.f32 %v976, %v2177
        %v2186 = vmul.f32 %v977, %v2178
        %v2187 = vmul.f32 %v978, %v2179
        %v2188 = vmul.f32 %v979, %v2180
        %v2189 = vmul.f32 %v980, %v2181
        %v2190 = vpack.c.bf16 %v2182, %v2182
        %v2191 = vpack.c.bf16 %v2183, %v2183
        %v2192 = vpack.c.bf16 %v2184, %v2184
        %v2193 = vpack.c.bf16 %v2185, %v2185
        %v2194 = vpack.c.bf16 %v2186, %v2186
        %v2195 = vpack.c.bf16 %v2187, %v2187
        %v2196 = vpack.c.bf16 %v2188, %v2188
        %v2197 = vpack.c.bf16 %v2189, %v2189
        %v2206 = vunpack.c.l.b16 %v2166
        %v2207 = vunpack.c.l.b16 %v2167
        %v2208 = vunpack.c.l.b16 %v2168
        %v2209 = vunpack.c.l.b16 %v2169
        %v2210 = vunpack.c.l.b16 %v2170
        %v2211 = vunpack.c.l.b16 %v2171
        %v2212 = vunpack.c.l.b16 %v2172
        %v2213 = vunpack.c.l.b16 %v2173
        %v2222 = vunpack.c.l.b16 %v2190
        %v2223 = vunpack.c.l.b16 %v2191
        %v2224 = vunpack.c.l.b16 %v2192
        %v2225 = vunpack.c.l.b16 %v2193
        %v2226 = vunpack.c.l.b16 %v2194
        %v2227 = vunpack.c.l.b16 %v2195
        %v2228 = vunpack.c.l.b16 %v2196
        %v2229 = vunpack.c.l.b16 %v2197
        %v2230 = vpack.c.b16 %v2222, %v2206
        %v2231 = vpack.c.b16 %v2223, %v2207
        %v2232 = vpack.c.b16 %v2224, %v2208
        %v2233 = vpack.c.b16 %v2225, %v2209
        %v2234 = vpack.c.b16 %v2226, %v2210
        %v2235 = vpack.c.b16 %v2227, %v2211
        %v2236 = vpack.c.b16 %v2228, %v2212
        %v2237 = vpack.c.b16 %v2229, %v2213
        %s2246 = smul.u32 %s33, 16
        %s2247 = smul.addr %s2246, 4
        %s2248 = scalar_lea.vmem [#allocation2], %s2247
        %2249 = vst [vmem:[%s2248] sm:$0xff] %v2230
        %2250 = vst [vmem:[%s2248 + $0x8] sm:$0xff] %v2231
        %2251 = vst [vmem:[%s2248 + $0x10] sm:$0xff] %v2232
        %2252 = vst [vmem:[%s2248 + $0x18] sm:$0xff] %v2233
        %2253 = vst [vmem:[%s2248 + $0x20] sm:$0xff] %v2234
        %2254 = vst [vmem:[%s2248 + $0x28] sm:$0xff] %v2235
        %2255 = vst [vmem:[%s2248 + $0x30] sm:$0xff] %v2236
        %2256 = vst [vmem:[%s2248 + $0x38] sm:$0xff] %v2237
        %p2257 = scmp.eq.s32.totalorder %s33, 1
        // Predicated region
        $region68: #{tpu_custom_call.1} parent=39 // pred_check
          %p2258 = pneg %p2257
        $region69: #{tpu_custom_call.1} parent=39 // pred_check_branch
          %2260 = sbr.rel (%p2258) target = $region71
        $region70: #{tpu_custom_call.1} parent=39 // pred_region
          %v2261 = vld [vmem:[#allocation8] sm:$0xff]
          %v2262 = vld [vmem:[#allocation8 + $0x8] sm:$0xff]
          %v2263 = vld [vmem:[#allocation8 + $0x10] sm:$0xff]
          %v2264 = vld [vmem:[#allocation8 + $0x18] sm:$0xff]
          %v2265 = vld [vmem:[#allocation8 + $0x20] sm:$0xff]
          %v2266 = vld [vmem:[#allocation8 + $0x28] sm:$0xff]
          %v2267 = vld [vmem:[#allocation8 + $0x30] sm:$0xff]
          %v2268 = vld [vmem:[#allocation8 + $0x38] sm:$0xff]
          %v2269 = vld [vmem:[#allocation8 + $0x40] sm:$0xff]
          %v2270 = vld [vmem:[#allocation8 + $0x48] sm:$0xff]
          %v2271 = vld [vmem:[#allocation8 + $0x50] sm:$0xff]
          %v2272 = vld [vmem:[#allocation8 + $0x58] sm:$0xff]
          %v2273 = vld [vmem:[#allocation8 + $0x60] sm:$0xff]
          %v2274 = vld [vmem:[#allocation8 + $0x68] sm:$0xff]
          %v2275 = vld [vmem:[#allocation8 + $0x70] sm:$0xff]
          %v2276 = vld [vmem:[#allocation8 + $0x78] sm:$0xff]
          %v2277 = vld [vmem:[#allocation8 + $0x80] sm:$0xff]
          %v2278 = vld [vmem:[#allocation8 + $0x88] sm:$0xff]
          %v2279 = vld [vmem:[#allocation8 + $0x90] sm:$0xff]
          %v2280 = vld [vmem:[#allocation8 + $0x98] sm:$0xff]
          %v2281 = vld [vmem:[#allocation8 + $0xa0] sm:$0xff]
          %v2282 = vld [vmem:[#allocation8 + $0xa8] sm:$0xff]
          %v2283 = vld [vmem:[#allocation8 + $0xb0] sm:$0xff]
          %v2284 = vld [vmem:[#allocation8 + $0xb8] sm:$0xff]
          %v2285 = vld [vmem:[#allocation8 + $0xc0] sm:$0xff]
          %v2286 = vld [vmem:[#allocation8 + $0xc8] sm:$0xff]
          %v2287 = vld [vmem:[#allocation8 + $0xd0] sm:$0xff]
          %v2288 = vld [vmem:[#allocation8 + $0xd8] sm:$0xff]
          %v2289 = vld [vmem:[#allocation8 + $0xe0] sm:$0xff]
          %v2290 = vld [vmem:[#allocation8 + $0xe8] sm:$0xff]
          %v2291 = vld [vmem:[#allocation8 + $0xf0] sm:$0xff]
          %v2292 = vld [vmem:[#allocation8 + $0xf8] sm:$0xff]
          %v2293 = vld [vmem:[#allocation8 + $0x100] sm:$0xff]
          %v2294 = vld [vmem:[#allocation8 + $0x108] sm:$0xff]
          %v2295 = vld [vmem:[#allocation8 + $0x110] sm:$0xff]
          %v2296 = vld [vmem:[#allocation8 + $0x118] sm:$0xff]
          %v2297 = vld [vmem:[#allocation8 + $0x120] sm:$0xff]
          %v2298 = vld [vmem:[#allocation8 + $0x128] sm:$0xff]
          %v2299 = vld [vmem:[#allocation8 + $0x130] sm:$0xff]
          %v2300 = vld [vmem:[#allocation8 + $0x138] sm:$0xff]
          %v2301 = vld [vmem:[#allocation8 + $0x140] sm:$0xff]
          %v2302 = vld [vmem:[#allocation8 + $0x148] sm:$0xff]
          %v2303 = vld [vmem:[#allocation8 + $0x150] sm:$0xff]
          %v2304 = vld [vmem:[#allocation8 + $0x158] sm:$0xff]
          %v2305 = vld [vmem:[#allocation8 + $0x160] sm:$0xff]
          %v2306 = vld [vmem:[#allocation8 + $0x168] sm:$0xff]
          %v2307 = vld [vmem:[#allocation8 + $0x170] sm:$0xff]
          %v2308 = vld [vmem:[#allocation8 + $0x178] sm:$0xff]
          %v2309 = vld [vmem:[#allocation8 + $0x180] sm:$0xff]
          %v2310 = vld [vmem:[#allocation8 + $0x188] sm:$0xff]
          %v2311 = vld [vmem:[#allocation8 + $0x190] sm:$0xff]
          %v2312 = vld [vmem:[#allocation8 + $0x198] sm:$0xff]
          %v2313 = vld [vmem:[#allocation8 + $0x1a0] sm:$0xff]
          %v2314 = vld [vmem:[#allocation8 + $0x1a8] sm:$0xff]
          %v2315 = vld [vmem:[#allocation8 + $0x1b0] sm:$0xff]
          %v2316 = vld [vmem:[#allocation8 + $0x1b8] sm:$0xff]
          %v2317 = vld [vmem:[#allocation8 + $0x1c0] sm:$0xff]
          %v2318 = vld [vmem:[#allocation8 + $0x1c8] sm:$0xff]
          %v2319 = vld [vmem:[#allocation8 + $0x1d0] sm:$0xff]
          %v2320 = vld [vmem:[#allocation8 + $0x1d8] sm:$0xff]
          %v2321 = vld [vmem:[#allocation8 + $0x1e0] sm:$0xff]
          %v2322 = vld [vmem:[#allocation8 + $0x1e8] sm:$0xff]
          %v2323 = vld [vmem:[#allocation8 + $0x1f0] sm:$0xff]
          %v2324 = vld [vmem:[#allocation8 + $0x1f8] sm:$0xff]
          %v2325 = vld [vmem:[#allocation2] sm:$0xff]
          %v2326 = vld [vmem:[#allocation2 + $0x8] sm:$0xff]
          %v2327 = vld [vmem:[#allocation2 + $0x10] sm:$0xff]
          %v2328 = vld [vmem:[#allocation2 + $0x18] sm:$0xff]
          %v2329 = vld [vmem:[#allocation2 + $0x20] sm:$0xff]
          %v2330 = vld [vmem:[#allocation2 + $0x28] sm:$0xff]
          %v2331 = vld [vmem:[#allocation2 + $0x30] sm:$0xff]
          %v2332 = vld [vmem:[#allocation2 + $0x38] sm:$0xff]
          %s2333 = scalar_lea.vmem [#allocation2], 64
          %v2334 = vld [vmem:[%s2333] sm:$0xff]
          %v2335 = vld [vmem:[%s2333 + $0x8] sm:$0xff]
          %v2336 = vld [vmem:[%s2333 + $0x10] sm:$0xff]
          %v2337 = vld [vmem:[%s2333 + $0x18] sm:$0xff]
          %v2338 = vld [vmem:[%s2333 + $0x20] sm:$0xff]
          %v2339 = vld [vmem:[%s2333 + $0x28] sm:$0xff]
          %v2340 = vld [vmem:[%s2333 + $0x30] sm:$0xff]
          %v2341 = vld [vmem:[%s2333 + $0x38] sm:$0xff]
          %v2350 = vunpack.c.l.b16 %v2334
          %v2351 = vunpack.c.h.b16 %v2334
          %v2352 = vunpack.c.l.b16 %v2335
          %v2353 = vunpack.c.h.b16 %v2335
          %v2354 = vunpack.c.l.b16 %v2336
          %v2355 = vunpack.c.h.b16 %v2336
          %v2356 = vunpack.c.l.b16 %v2337
          %v2357 = vunpack.c.h.b16 %v2337
          %v2358 = vunpack.c.l.b16 %v2338
          %v2359 = vunpack.c.h.b16 %v2338
          %v2360 = vunpack.c.l.b16 %v2339
          %v2361 = vunpack.c.h.b16 %v2339
          %v2362 = vunpack.c.l.b16 %v2340
          %v2363 = vunpack.c.h.b16 %v2340
          %v2364 = vunpack.c.l.b16 %v2341
          %v2365 = vunpack.c.h.b16 %v2341
          %v2366 = vpack.c.b16 %v2352, %v2350
          %v2367 = vpack.c.b16 %v2353, %v2351
          %v2368 = vpack.c.b16 %v2356, %v2354
          %v2369 = vpack.c.b16 %v2357, %v2355
          %v2370 = vpack.c.b16 %v2360, %v2358
          %v2371 = vpack.c.b16 %v2361, %v2359
          %v2372 = vpack.c.b16 %v2364, %v2362
          %v2373 = vpack.c.b16 %v2365, %v2363
          %v2414 = vunpack.c.l.b16 %v2293
          %v2415 = vunpack.c.h.b16 %v2293
          %v2416 = vunpack.c.l.b16 %v2294
          %v2417 = vunpack.c.h.b16 %v2294
          %v2418 = vunpack.c.l.b16 %v2295
          %v2419 = vunpack.c.h.b16 %v2295
          %v2420 = vunpack.c.l.b16 %v2296
          %v2421 = vunpack.c.h.b16 %v2296
          %v2422 = vunpack.c.l.b16 %v2297
          %v2423 = vunpack.c.h.b16 %v2297
          %v2424 = vunpack.c.l.b16 %v2298
          %v2425 = vunpack.c.h.b16 %v2298
          %v2426 = vunpack.c.l.b16 %v2299
          %v2427 = vunpack.c.h.b16 %v2299
          %v2428 = vunpack.c.l.b16 %v2300
          %v2429 = vunpack.c.h.b16 %v2300
          %v2430 = vunpack.c.l.b16 %v2301
          %v2431 = vunpack.c.h.b16 %v2301
          %v2432 = vunpack.c.l.b16 %v2302
          %v2433 = vunpack.c.h.b16 %v2302
          %v2434 = vunpack.c.l.b16 %v2303
          %v2435 = vunpack.c.h.b16 %v2303
          %v2436 = vunpack.c.l.b16 %v2304
          %v2437 = vunpack.c.h.b16 %v2304
          %v2438 = vunpack.c.l.b16 %v2305
          %v2439 = vunpack.c.h.b16 %v2305
          %v2440 = vunpack.c.l.b16 %v2306
          %v2441 = vunpack.c.h.b16 %v2306
          %v2442 = vunpack.c.l.b16 %v2307
          %v2443 = vunpack.c.h.b16 %v2307
          %v2444 = vunpack.c.l.b16 %v2308
          %v2445 = vunpack.c.h.b16 %v2308
          %v2446 = vunpack.c.l.b16 %v2309
          %v2447 = vunpack.c.h.b16 %v2309
          %v2448 = vunpack.c.l.b16 %v2310
          %v2449 = vunpack.c.h.b16 %v2310
          %v2450 = vunpack.c.l.b16 %v2311
          %v2451 = vunpack.c.h.b16 %v2311
          %v2452 = vunpack.c.l.b16 %v2312
          %v2453 = vunpack.c.h.b16 %v2312
          %v2454 = vunpack.c.l.b16 %v2313
          %v2455 = vunpack.c.h.b16 %v2313
          %v2456 = vunpack.c.l.b16 %v2314
          %v2457 = vunpack.c.h.b16 %v2314
          %v2458 = vunpack.c.l.b16 %v2315
          %v2459 = vunpack.c.h.b16 %v2315
          %v2460 = vunpack.c.l.b16 %v2316
          %v2461 = vunpack.c.h.b16 %v2316
          %v2462 = vunpack.c.l.b16 %v2317
          %v2463 = vunpack.c.h.b16 %v2317
          %v2464 = vunpack.c.l.b16 %v2318
          %v2465 = vunpack.c.h.b16 %v2318
          %v2466 = vunpack.c.l.b16 %v2319
          %v2467 = vunpack.c.h.b16 %v2319
          %v2468 = vunpack.c.l.b16 %v2320
          %v2469 = vunpack.c.h.b16 %v2320
          %v2470 = vunpack.c.l.b16 %v2321
          %v2471 = vunpack.c.h.b16 %v2321
          %v2472 = vunpack.c.l.b16 %v2322
          %v2473 = vunpack.c.h.b16 %v2322
          %v2474 = vunpack.c.l.b16 %v2323
          %v2475 = vunpack.c.h.b16 %v2323
          %v2476 = vunpack.c.l.b16 %v2324
          %v2477 = vunpack.c.h.b16 %v2324
          %v2478 = vpack.c.b16 %v2416, %v2414
          %v2479 = vpack.c.b16 %v2417, %v2415
          %v2480 = vpack.c.b16 %v2420, %v2418
          %v2481 = vpack.c.b16 %v2421, %v2419
          %v2482 = vpack.c.b16 %v2424, %v2422
          %v2483 = vpack.c.b16 %v2425, %v2423
          %v2484 = vpack.c.b16 %v2428, %v2426
          %v2485 = vpack.c.b16 %v2429, %v2427
          %v2486 = vpack.c.b16 %v2432, %v2430
          %v2487 = vpack.c.b16 %v2433, %v2431
          %v2488 = vpack.c.b16 %v2436, %v2434
          %v2489 = vpack.c.b16 %v2437, %v2435
          %v2490 = vpack.c.b16 %v2440, %v2438
          %v2491 = vpack.c.b16 %v2441, %v2439
          %v2492 = vpack.c.b16 %v2444, %v2442
          %v2493 = vpack.c.b16 %v2445, %v2443
          %v2494 = vpack.c.b16 %v2448, %v2446
          %v2495 = vpack.c.b16 %v2449, %v2447
          %v2496 = vpack.c.b16 %v2452, %v2450
          %v2497 = vpack.c.b16 %v2453, %v2451
          %v2498 = vpack.c.b16 %v2456, %v2454
          %v2499 = vpack.c.b16 %v2457, %v2455
          %v2500 = vpack.c.b16 %v2460, %v2458
          %v2501 = vpack.c.b16 %v2461, %v2459
          %v2502 = vpack.c.b16 %v2464, %v2462
          %v2503 = vpack.c.b16 %v2465, %v2463
          %v2504 = vpack.c.b16 %v2468, %v2466
          %v2505 = vpack.c.b16 %v2469, %v2467
          %v2506 = vpack.c.b16 %v2472, %v2470
          %v2507 = vpack.c.b16 %v2473, %v2471
          %v2508 = vpack.c.b16 %v2476, %v2474
          %v2509 = vpack.c.b16 %v2477, %v2475
          %2542 = vmatpush.bf16.msra.mxu0 %v2492
          %2543 = vmatpush.bf16.msra.mxu0 %v2490
          %2544 = vmatpush.bf16.msra.mxu0 %v2488
          %2545 = vmatpush.bf16.msra.mxu0 %v2486
          %2546 = vmatpush.bf16.msra.mxu0 %v2484
          %2547 = vmatpush.bf16.msra.mxu0 %v2482
          %2548 = vmatpush.bf16.msra.mxu0 %v2480
          %2549 = vmatpush.bf16.msra.mxu0 %v2478
          %2550 = vmatmul.bf16.gmra.mxu0 %v2366
          %v2551 = vpop.f32.mrf.mxu0
          %v2552 = vadd.f32 0.0, %v2551
          %v2553 = vpop.f32.mrf.mxu0
          %v2554 = vadd.f32 0.0, %v2553
          %2555 = vmatmul.bf16.gmra.mxu0 %v2368
          %v2556 = vpop.f32.mrf.mxu0
          %v2557 = vadd.f32 0.0, %v2556
          %v2558 = vpop.f32.mrf.mxu0
          %v2559 = vadd.f32 0.0, %v2558
          %2560 = vmatmul.bf16.gmra.mxu0 %v2370
          %v2561 = vpop.f32.mrf.mxu0
          %v2562 = vadd.f32 0.0, %v2561
          %v2563 = vpop.f32.mrf.mxu0
          %v2564 = vadd.f32 0.0, %v2563
          %2565 = vmatmul.bf16.gmra.mxu0 %v2372
          %v2566 = vpop.f32.mrf.mxu0
          %v2567 = vadd.f32 0.0, %v2566
          %v2568 = vpop.f32.mrf.mxu0
          %v2569 = vadd.f32 0.0, %v2568
          %2570 = vdwg.mxu0
          %2571 = vmatpush.bf16.msra.mxu0 %v2508
          %2572 = vmatpush.bf16.msra.mxu0 %v2506
          %2573 = vmatpush.bf16.msra.mxu0 %v2504
          %2574 = vmatpush.bf16.msra.mxu0 %v2502
          %2575 = vmatpush.bf16.msra.mxu0 %v2500
          %2576 = vmatpush.bf16.msra.mxu0 %v2498
          %2577 = vmatpush.bf16.msra.mxu0 %v2496
          %2578 = vmatpush.bf16.msra.mxu0 %v2494
          %2579 = vmatmul.bf16.gmra.mxu0 %v2367
          %v2580 = vpop.f32.mrf.mxu0
          %v2581 = vadd.f32 %v2552, %v2580
          %v2582 = vpop.f32.mrf.mxu0
          %v2583 = vadd.f32 %v2554, %v2582
          %2584 = vmatmul.bf16.gmra.mxu0 %v2369
          %v2585 = vpop.f32.mrf.mxu0
          %v2586 = vadd.f32 %v2557, %v2585
          %v2587 = vpop.f32.mrf.mxu0
          %v2588 = vadd.f32 %v2559, %v2587
          %2589 = vmatmul.bf16.gmra.mxu0 %v2371
          %v2590 = vpop.f32.mrf.mxu0
          %v2591 = vadd.f32 %v2562, %v2590
          %v2592 = vpop.f32.mrf.mxu0
          %v2593 = vadd.f32 %v2564, %v2592
          %2594 = vmatmul.bf16.gmra.mxu0 %v2373
          %v2595 = vpop.f32.mrf.mxu0
          %v2596 = vadd.f32 %v2567, %v2595
          %v2597 = vpop.f32.mrf.mxu0
          %v2598 = vadd.f32 %v2569, %v2597
          %2599 = vdwg.mxu0
          %2600 = vmatpush.bf16.msra.mxu0 %v2493
          %2601 = vmatpush.bf16.msra.mxu0 %v2491
          %2602 = vmatpush.bf16.msra.mxu0 %v2489
          %2603 = vmatpush.bf16.msra.mxu0 %v2487
          %2604 = vmatpush.bf16.msra.mxu0 %v2485
          %2605 = vmatpush.bf16.msra.mxu0 %v2483
          %2606 = vmatpush.bf16.msra.mxu0 %v2481
          %2607 = vmatpush.bf16.msra.mxu0 %v2479
          %2608 = vmatmul.bf16.gmra.mxu0 %v2366
          %v2609 = vpop.f32.mrf.mxu0
          %v2610 = vadd.f32 0.0, %v2609
          %v2611 = vpop.f32.mrf.mxu0
          %v2612 = vadd.f32 0.0, %v2611
          %2613 = vmatmul.bf16.gmra.mxu0 %v2368
          %v2614 = vpop.f32.mrf.mxu0
          %v2615 = vadd.f32 0.0, %v2614
          %v2616 = vpop.f32.mrf.mxu0
          %v2617 = vadd.f32 0.0, %v2616
          %2618 = vmatmul.bf16.gmra.mxu0 %v2370
          %v2619 = vpop.f32.mrf.mxu0
          %v2620 = vadd.f32 0.0, %v2619
          %v2621 = vpop.f32.mrf.mxu0
          %v2622 = vadd.f32 0.0, %v2621
          %2623 = vmatmul.bf16.gmra.mxu0 %v2372
          %v2624 = vpop.f32.mrf.mxu0
          %v2625 = vadd.f32 0.0, %v2624
          %v2626 = vpop.f32.mrf.mxu0
          %v2627 = vadd.f32 0.0, %v2626
          %2628 = vdwg.mxu0
          %2629 = vmatpush.bf16.msra.mxu0 %v2509
          %2630 = vmatpush.bf16.msra.mxu0 %v2507
          %2631 = vmatpush.bf16.msra.mxu0 %v2505
          %2632 = vmatpush.bf16.msra.mxu0 %v2503
          %2633 = vmatpush.bf16.msra.mxu0 %v2501
          %2634 = vmatpush.bf16.msra.mxu0 %v2499
          %2635 = vmatpush.bf16.msra.mxu0 %v2497
          %2636 = vmatpush.bf16.msra.mxu0 %v2495
          %2637 = vmatmul.bf16.gmra.mxu0 %v2367
          %v2638 = vpop.f32.mrf.mxu0
          %v2639 = vadd.f32 %v2610, %v2638
          %v2640 = vpop.f32.mrf.mxu0
          %v2641 = vadd.f32 %v2612, %v2640
          %2642 = vmatmul.bf16.gmra.mxu0 %v2369
          %v2643 = vpop.f32.mrf.mxu0
          %v2644 = vadd.f32 %v2615, %v2643
          %v2645 = vpop.f32.mrf.mxu0
          %v2646 = vadd.f32 %v2617, %v2645
          %2647 = vmatmul.bf16.gmra.mxu0 %v2371
          %v2648 = vpop.f32.mrf.mxu0
          %v2649 = vadd.f32 %v2620, %v2648
          %v2650 = vpop.f32.mrf.mxu0
          %v2651 = vadd.f32 %v2622, %v2650
          %2652 = vmatmul.bf16.gmra.mxu0 %v2373
          %v2653 = vpop.f32.mrf.mxu0
          %v2654 = vadd.f32 %v2625, %v2653
          %v2655 = vpop.f32.mrf.mxu0
          %v2656 = vadd.f32 %v2627, %v2655
          %2657 = vdwg.mxu0
          %v2666 = vunpack.c.l.b16 %v2325
          %v2667 = vunpack.c.h.b16 %v2325
          %v2668 = vunpack.c.l.b16 %v2326
          %v2669 = vunpack.c.h.b16 %v2326
          %v2670 = vunpack.c.l.b16 %v2327
          %v2671 = vunpack.c.h.b16 %v2327
          %v2672 = vunpack.c.l.b16 %v2328
          %v2673 = vunpack.c.h.b16 %v2328
          %v2674 = vunpack.c.l.b16 %v2329
          %v2675 = vunpack.c.h.b16 %v2329
          %v2676 = vunpack.c.l.b16 %v2330
          %v2677 = vunpack.c.h.b16 %v2330
          %v2678 = vunpack.c.l.b16 %v2331
          %v2679 = vunpack.c.h.b16 %v2331
          %v2680 = vunpack.c.l.b16 %v2332
          %v2681 = vunpack.c.h.b16 %v2332
          %v2682 = vpack.c.b16 %v2668, %v2666
          %v2683 = vpack.c.b16 %v2669, %v2667
          %v2684 = vpack.c.b16 %v2672, %v2670
          %v2685 = vpack.c.b16 %v2673, %v2671
          %v2686 = vpack.c.b16 %v2676, %v2674
          %v2687 = vpack.c.b16 %v2677, %v2675
          %v2688 = vpack.c.b16 %v2680, %v2678
          %v2689 = vpack.c.b16 %v2681, %v2679
          %v2730 = vunpack.c.l.b16 %v2261
          %v2731 = vunpack.c.h.b16 %v2261
          %v2732 = vunpack.c.l.b16 %v2262
          %v2733 = vunpack.c.h.b16 %v2262
          %v2734 = vunpack.c.l.b16 %v2263
          %v2735 = vunpack.c.h.b16 %v2263
          %v2736 = vunpack.c.l.b16 %v2264
          %v2737 = vunpack.c.h.b16 %v2264
          %v2738 = vunpack.c.l.b16 %v2265
          %v2739 = vunpack.c.h.b16 %v2265
          %v2740 = vunpack.c.l.b16 %v2266
          %v2741 = vunpack.c.h.b16 %v2266
          %v2742 = vunpack.c.l.b16 %v2267
          %v2743 = vunpack.c.h.b16 %v2267
          %v2744 = vunpack.c.l.b16 %v2268
          %v2745 = vunpack.c.h.b16 %v2268
          %v2746 = vunpack.c.l.b16 %v2269
          %v2747 = vunpack.c.h.b16 %v2269
          %v2748 = vunpack.c.l.b16 %v2270
          %v2749 = vunpack.c.h.b16 %v2270
          %v2750 = vunpack.c.l.b16 %v2271
          %v2751 = vunpack.c.h.b16 %v2271
          %v2752 = vunpack.c.l.b16 %v2272
          %v2753 = vunpack.c.h.b16 %v2272
          %v2754 = vunpack.c.l.b16 %v2273
          %v2755 = vunpack.c.h.b16 %v2273
          %v2756 = vunpack.c.l.b16 %v2274
          %v2757 = vunpack.c.h.b16 %v2274
          %v2758 = vunpack.c.l.b16 %v2275
          %v2759 = vunpack.c.h.b16 %v2275
          %v2760 = vunpack.c.l.b16 %v2276
          %v2761 = vunpack.c.h.b16 %v2276
          %v2762 = vunpack.c.l.b16 %v2277
          %v2763 = vunpack.c.h.b16 %v2277
          %v2764 = vunpack.c.l.b16 %v2278
          %v2765 = vunpack.c.h.b16 %v2278
          %v2766 = vunpack.c.l.b16 %v2279
          %v2767 = vunpack.c.h.b16 %v2279
          %v2768 = vunpack.c.l.b16 %v2280
          %v2769 = vunpack.c.h.b16 %v2280
          %v2770 = vunpack.c.l.b16 %v2281
          %v2771 = vunpack.c.h.b16 %v2281
          %v2772 = vunpack.c.l.b16 %v2282
          %v2773 = vunpack.c.h.b16 %v2282
          %v2774 = vunpack.c.l.b16 %v2283
          %v2775 = vunpack.c.h.b16 %v2283
          %v2776 = vunpack.c.l.b16 %v2284
          %v2777 = vunpack.c.h.b16 %v2284
          %v2778 = vunpack.c.l.b16 %v2285
          %v2779 = vunpack.c.h.b16 %v2285
          %v2780 = vunpack.c.l.b16 %v2286
          %v2781 = vunpack.c.h.b16 %v2286
          %v2782 = vunpack.c.l.b16 %v2287
          %v2783 = vunpack.c.h.b16 %v2287
          %v2784 = vunpack.c.l.b16 %v2288
          %v2785 = vunpack.c.h.b16 %v2288
          %v2786 = vunpack.c.l.b16 %v2289
          %v2787 = vunpack.c.h.b16 %v2289
          %v2788 = vunpack.c.l.b16 %v2290
          %v2789 = vunpack.c.h.b16 %v2290
          %v2790 = vunpack.c.l.b16 %v2291
          %v2791 = vunpack.c.h.b16 %v2291
          %v2792 = vunpack.c.l.b16 %v2292
          %v2793 = vunpack.c.h.b16 %v2292
          %v2794 = vpack.c.b16 %v2732, %v2730
          %v2795 = vpack.c.b16 %v2733, %v2731
          %v2796 = vpack.c.b16 %v2736, %v2734
          %v2797 = vpack.c.b16 %v2737, %v2735
          %v2798 = vpack.c.b16 %v2740, %v2738
          %v2799 = vpack.c.b16 %v2741, %v2739
          %v2800 = vpack.c.b16 %v2744, %v2742
          %v2801 = vpack.c.b16 %v2745, %v2743
          %v2802 = vpack.c.b16 %v2748, %v2746
          %v2803 = vpack.c.b16 %v2749, %v2747
          %v2804 = vpack.c.b16 %v2752, %v2750
          %v2805 = vpack.c.b16 %v2753, %v2751
          %v2806 = vpack.c.b16 %v2756, %v2754
          %v2807 = vpack.c.b16 %v2757, %v2755
          %v2808 = vpack.c.b16 %v2760, %v2758
          %v2809 = vpack.c.b16 %v2761, %v2759
          %v2810 = vpack.c.b16 %v2764, %v2762
          %v2811 = vpack.c.b16 %v2765, %v2763
          %v2812 = vpack.c.b16 %v2768, %v2766
          %v2813 = vpack.c.b16 %v2769, %v2767
          %v2814 = vpack.c.b16 %v2772, %v2770
          %v2815 = vpack.c.b16 %v2773, %v2771
          %v2816 = vpack.c.b16 %v2776, %v2774
          %v2817 = vpack.c.b16 %v2777, %v2775
          %v2818 = vpack.c.b16 %v2780, %v2778
          %v2819 = vpack.c.b16 %v2781, %v2779
          %v2820 = vpack.c.b16 %v2784, %v2782
          %v2821 = vpack.c.b16 %v2785, %v2783
          %v2822 = vpack.c.b16 %v2788, %v2786
          %v2823 = vpack.c.b16 %v2789, %v2787
          %v2824 = vpack.c.b16 %v2792, %v2790
          %v2825 = vpack.c.b16 %v2793, %v2791
          %2858 = vmatpush.bf16.msra.mxu0 %v2808
          %2859 = vmatpush.bf16.msra.mxu0 %v2806
          %2860 = vmatpush.bf16.msra.mxu0 %v2804
          %2861 = vmatpush.bf16.msra.mxu0 %v2802
          %2862 = vmatpush.bf16.msra.mxu0 %v2800
          %2863 = vmatpush.bf16.msra.mxu0 %v2798
          %2864 = vmatpush.bf16.msra.mxu0 %v2796
          %2865 = vmatpush.bf16.msra.mxu0 %v2794
          %2866 = vmatmul.bf16.gmra.mxu0 %v2682
          %v2867 = vpop.f32.mrf.mxu0
          %v2868 = vadd.f32 %v2581, %v2867
          %v2869 = vpop.f32.mrf.mxu0
          %v2870 = vadd.f32 %v2583, %v2869
          %2871 = vmatmul.bf16.gmra.mxu0 %v2684
          %v2872 = vpop.f32.mrf.mxu0
          %v2873 = vadd.f32 %v2586, %v2872
          %v2874 = vpop.f32.mrf.mxu0
          %v2875 = vadd.f32 %v2588, %v2874
          %2876 = vmatmul.bf16.gmra.mxu0 %v2686
          %v2877 = vpop.f32.mrf.mxu0
          %v2878 = vadd.f32 %v2591, %v2877
          %v2879 = vpop.f32.mrf.mxu0
          %v2880 = vadd.f32 %v2593, %v2879
          %2881 = vmatmul.bf16.gmra.mxu0 %v2688
          %v2882 = vpop.f32.mrf.mxu0
          %v2883 = vadd.f32 %v2596, %v2882
          %v2884 = vpop.f32.mrf.mxu0
          %v2885 = vadd.f32 %v2598, %v2884
          %2886 = vdwg.mxu0
          %2887 = vmatpush.bf16.msra.mxu0 %v2824
          %2888 = vmatpush.bf16.msra.mxu0 %v2822
          %2889 = vmatpush.bf16.msra.mxu0 %v2820
          %2890 = vmatpush.bf16.msra.mxu0 %v2818
          %2891 = vmatpush.bf16.msra.mxu0 %v2816
          %2892 = vmatpush.bf16.msra.mxu0 %v2814
          %2893 = vmatpush.bf16.msra.mxu0 %v2812
          %2894 = vmatpush.bf16.msra.mxu0 %v2810
          %2895 = vmatmul.bf16.gmra.mxu0 %v2683
          %v2896 = vpop.f32.mrf.mxu0
          %v2897 = vadd.f32 %v2868, %v2896
          %v2898 = vpop.f32.mrf.mxu0
          %v2899 = vadd.f32 %v2870, %v2898
          %2900 = vmatmul.bf16.gmra.mxu0 %v2685
          %v2901 = vpop.f32.mrf.mxu0
          %v2902 = vadd.f32 %v2873, %v2901
          %v2903 = vpop.f32.mrf.mxu0
          %v2904 = vadd.f32 %v2875, %v2903
          %2905 = vmatmul.bf16.gmra.mxu0 %v2687
          %v2906 = vpop.f32.mrf.mxu0
          %v2907 = vadd.f32 %v2878, %v2906
          %v2908 = vpop.f32.mrf.mxu0
          %v2909 = vadd.f32 %v2880, %v2908
          %2910 = vmatmul.bf16.gmra.mxu0 %v2689
          %v2911 = vpop.f32.mrf.mxu0
          %v2912 = vadd.f32 %v2883, %v2911
          %v2913 = vpop.f32.mrf.mxu0
          %v2914 = vadd.f32 %v2885, %v2913
          %2915 = vdwg.mxu0
          %2916 = vmatpush.bf16.msra.mxu0 %v2809
          %2917 = vmatpush.bf16.msra.mxu0 %v2807
          %2918 = vmatpush.bf16.msra.mxu0 %v2805
          %2919 = vmatpush.bf16.msra.mxu0 %v2803
          %2920 = vmatpush.bf16.msra.mxu0 %v2801
          %2921 = vmatpush.bf16.msra.mxu0 %v2799
          %2922 = vmatpush.bf16.msra.mxu0 %v2797
          %2923 = vmatpush.bf16.msra.mxu0 %v2795
          %2924 = vmatmul.bf16.gmra.mxu0 %v2682
          %v2925 = vpop.f32.mrf.mxu0
          %v2926 = vadd.f32 %v2639, %v2925
          %v2927 = vpop.f32.mrf.mxu0
          %v2928 = vadd.f32 %v2641, %v2927
          %2929 = vmatmul.bf16.gmra.mxu0 %v2684
          %v2930 = vpop.f32.mrf.mxu0
          %v2931 = vadd.f32 %v2644, %v2930
          %v2932 = vpop.f32.mrf.mxu0
          %v2933 = vadd.f32 %v2646, %v2932
          %2934 = vmatmul.bf16.gmra.mxu0 %v2686
          %v2935 = vpop.f32.mrf.mxu0
          %v2936 = vadd.f32 %v2649, %v2935
          %v2937 = vpop.f32.mrf.mxu0
          %v2938 = vadd.f32 %v2651, %v2937
          %2939 = vmatmul.bf16.gmra.mxu0 %v2688
          %v2940 = vpop.f32.mrf.mxu0
          %v2941 = vadd.f32 %v2654, %v2940
          %v2942 = vpop.f32.mrf.mxu0
          %v2943 = vadd.f32 %v2656, %v2942
          %2944 = vdwg.mxu0
          %2945 = vmatpush.bf16.msra.mxu0 %v2825
          %2946 = vmatpush.bf16.msra.mxu0 %v2823
          %2947 = vmatpush.bf16.msra.mxu0 %v2821
          %2948 = vmatpush.bf16.msra.mxu0 %v2819
          %2949 = vmatpush.bf16.msra.mxu0 %v2817
          %2950 = vmatpush.bf16.msra.mxu0 %v2815
          %2951 = vmatpush.bf16.msra.mxu0 %v2813
          %2952 = vmatpush.bf16.msra.mxu0 %v2811
          %2953 = vmatmul.bf16.gmra.mxu0 %v2683
          %v2954 = vpop.f32.mrf.mxu0
          %v2955 = vadd.f32 %v2926, %v2954
          %v2956 = vpop.f32.mrf.mxu0
          %v2957 = vadd.f32 %v2928, %v2956
          %2958 = vmatmul.bf16.gmra.mxu0 %v2685
          %v2959 = vpop.f32.mrf.mxu0
          %v2960 = vadd.f32 %v2931, %v2959
          %v2961 = vpop.f32.mrf.mxu0
          %v2962 = vadd.f32 %v2933, %v2961
          %2963 = vmatmul.bf16.gmra.mxu0 %v2687
          %v2964 = vpop.f32.mrf.mxu0
          %v2965 = vadd.f32 %v2936, %v2964
          %v2966 = vpop.f32.mrf.mxu0
          %v2967 = vadd.f32 %v2938, %v2966
          %2968 = vmatmul.bf16.gmra.mxu0 %v2689
          %v2969 = vpop.f32.mrf.mxu0
          %v2970 = vadd.f32 %v2941, %v2969
          %v2971 = vpop.f32.mrf.mxu0
          %v2972 = vadd.f32 %v2943, %v2971
          %2973 = vdwg.mxu0
          %2974 = vst [vmem:[%s356] sm:$0xff] %v2897
          %2975 = vst [vmem:[%s356 + $0x8] sm:$0xff] %v2955
          %2976 = vst [vmem:[%s356 + $0x10] sm:$0xff] %v2899
          %2977 = vst [vmem:[%s356 + $0x18] sm:$0xff] %v2957
          %2978 = vst [vmem:[%s356 + $0x20] sm:$0xff] %v2902
          %2979 = vst [vmem:[%s356 + $0x28] sm:$0xff] %v2960
          %2980 = vst [vmem:[%s356 + $0x30] sm:$0xff] %v2904
          %2981 = vst [vmem:[%s356 + $0x38] sm:$0xff] %v2962
          %2982 = vst [vmem:[%s356 + $0x40] sm:$0xff] %v2907
          %2983 = vst [vmem:[%s356 + $0x48] sm:$0xff] %v2965
          %2984 = vst [vmem:[%s356 + $0x50] sm:$0xff] %v2909
          %2985 = vst [vmem:[%s356 + $0x58] sm:$0xff] %v2967
          %2986 = vst [vmem:[%s356 + $0x60] sm:$0xff] %v2912
          %2987 = vst [vmem:[%s356 + $0x68] sm:$0xff] %v2970
          %2988 = vst [vmem:[%s356 + $0x70] sm:$0xff] %v2914
          %2989 = vst [vmem:[%s356 + $0x78] sm:$0xff] %v2972
        $region71: #{tpu_custom_call.1} parent=39 // pred_fallthru
          _
        %s2990 = sand.u32 %s170, 1
        %s2991 = scalar_lea.sflag [#allocation5], %s2990
        %s2992 = sand.u32 %s170, 1
        %s2993 = smul.addr %s2992, 128
        %s2994 = scalar_lea.vmem [#allocation12], %s2993
        // Predicated region
        $region72: #{tpu_custom_call.1} parent=39 // pred_check
          %p2995 = pneg %p180
        $region73: #{tpu_custom_call.1} parent=39 // pred_check_branch
          %2997 = sbr.rel (%p2995) target = $region75
        $region74: #{tpu_custom_call.1} parent=39 // pred_region
          %s2998 = smul.u32 8, %s32
          %3000 = vsyncadd %s2991, 0
          %s3001 = smul.addr %s2998, 2
          %s3002 = smul.addr %s31, 32
          %s3003 = sadd.s32 %s3001, %s3002
          %s3004 = smul.addr %s3003, 8
          %s3005 = scalar_lea.hbm %s5, %s3004
          %s3006 = sshll.u32 %s2994, 4
          %s3007 = int_to_ptr.vmem [resolvable:$true] %s3006
          %s3008 = sshll.u32 %s3005, 4
          %s3009 = int_to_ptr.hbm [resolvable:$true] %s3008
          %3014 = dma.vmem_to_hbm [thread:$0]  %s3007, 2048, %s3009, %s2991, 256, 256, 16
        $region75: #{tpu_custom_call.1} parent=39 // pred_fallthru
          _
      $region40: #{tpu_custom_call.1} parent=5 // pred_fallthru
        _
      %p3015 = scmp.le.s32.totalorder 2, %s21
      // Predicated region
      $region76: #{tpu_custom_call.1} parent=5 // pred_check
        %p3016 = pneg %p3015
      $region77: #{tpu_custom_call.1} parent=5 // pred_check_branch
        %3018 = sbr.rel (%p3016) target = $region79
      $region78: #{tpu_custom_call.1} parent=5 // pred_region
        %s3019 = ssub.s32 %s21, 2
        // Predicated region
        $region80: #{tpu_custom_call.1} parent=78 // pred_check
          %p3020 = pneg %p186
        $region81: #{tpu_custom_call.1} parent=78 // pred_check_branch
          %3022 = sbr.rel (%p3020) target = $region83
        $region82: #{tpu_custom_call.1} parent=78 // pred_region
          %s3023 = sand.u32 %s171, 1
          %s3024 = scalar_lea.sflag [#allocation5], %s3023
          %s3025 = sand.u32 %s171, 1
          %s3026 = smul.addr %s3025, 128
          %s3027 = scalar_lea.vmem [#allocation12], %s3026
          %3029 = dma.done %s3024, 2048
        $region83: #{tpu_custom_call.1} parent=78 // pred_fallthru
          _
      $region79: #{tpu_custom_call.1} parent=5 // pred_fallthru
        _
    $region6: #{tpu_custom_call.1} parent=1 // loop_footer
      %s25 = sadd.s32 1, %s21
    $region7: #{tpu_custom_call.1} parent=1 // loop_footer_branch
      %20 = sbr.rel target = $region3
    $region8: #{tpu_custom_call.1} parent=1 // loop_exit
      _
    %3030 = vsyncpa [#allocation4], 1
    %s3031 = scalar_lea.sflag [#allocation4], 1
    %3032 = vsyncpa %s3031, 1
    %3033 = vsyncpa [#allocation7], 1
    %s3034 = scalar_lea.sflag [#allocation7], 1
    %3035 = vsyncpa %s3034, 1
    %3036 = vsyncpa [#allocation10], 1
    %3037 = vsyncpa [#allocation5], 1
    %s3038 = scalar_lea.sflag [#allocation5], 1
    %3039 = vsyncpa %s3038, 1

</llo_original>
